<compile_context>
chip_gen: v6e
topology: v6e:2x2x1
jax: 0.10.0
libtpu: 0.0.40
codegen_flags: <defaults>
</compile_context>

<pallas_src>
import functools

import jax
import jax.numpy as jnp
from jax.experimental import pallas as pl
from jax.experimental.pallas import tpu as pltpu


def _round_up(v: int, m: int) -> int:
    return (v + m - 1) // m * m


def _lightgcn_kernel(a_ref, x_ref, o_ref, xb0, xb1, *, tm: int,
                     inv_count: float):
    """Grid = (num_layers, N_pad // tm).

    a_ref: (tm, N_pad) bf16 tile of A_norm          (streamed per step)
    x_ref: (N_pad, H_pad) bf16 input embeddings     (resident, fetched once)
    o_ref: (N_pad, H_pad) f32 resident output block = running sum of
           embeddings; scaled to the mean at the last layer, written back to
           HBM once at grid end.
    xb0/xb1: (N_pad, H_pad) bf16 ping-pong buffers holding the current layer's
           output (layer l writes xb0 if l is even, xb1 if l is odd).
    """
    l = pl.program_id(0)
    i = pl.program_id(1)
    nl = pl.num_programs(0)

    row = pl.multiple_of(i * tm, tm)
    rows = pl.ds(row, tm)
    is_last = l == nl - 1

    def do_layer(src_val, prev_sum, dst_ref):
        # One fat MXU matmul per (layer, row-tile) step; f32 accumulation.
        out = jnp.dot(a_ref[...], src_val, preferred_element_type=jnp.float32)
        new_sum = prev_sum + out

        @pl.when(is_last)
        def _():
            # Final layer: emit the mean for this row tile.
            o_ref[rows, :] = new_sum * inv_count

        @pl.when(jnp.logical_not(is_last))
        def _():
            # Stash this layer's output for the next layer and update the sum.
            dst_ref[rows, :] = out.astype(jnp.bfloat16)
            o_ref[rows, :] = new_sum

    # Layer 0: read the resident input block directly; lazily init the running
    # sum per row tile (no prologue full-array copies).
    @pl.when(l == 0)
    def _():
        do_layer(x_ref[...], x_ref[rows, :].astype(jnp.float32), xb0)

    is_odd = (l & 1) == 1

    # Odd layers read xb0 (written by the previous even layer), write xb1.
    @pl.when(is_odd)
    def _():
        do_layer(xb0[...], o_ref[rows, :], xb1)

    # Even layers > 0 read xb1, write xb0.
    @pl.when(jnp.logical_and(l > 0, jnp.logical_not(is_odd)))
    def _():
        do_layer(xb1[...], o_ref[rows, :], xb0)


def _build_norm_adjacency(edge_index: jnp.ndarray, num_nodes: int) -> jnp.ndarray:
    """Plain-JAX glue: self-loops + degree normalization, densified into
    A_norm[col, row] so that each GCN layer is A_norm @ x (uses the MXU)."""
    row, col = edge_index[0], edge_index[1]
    loops = jnp.arange(num_nodes, dtype=edge_index.dtype)
    row = jnp.concatenate([row, loops])
    col = jnp.concatenate([col, loops])
    deg = jnp.zeros((num_nodes,), dtype=jnp.float32).at[col].add(1.0)
    deg_inv_sqrt = jnp.where(deg > 0, deg ** -0.5, 0.0)
    norm = deg_inv_sqrt[row] * deg_inv_sqrt[col]
    # out[col] += norm * x[row]  <=>  A_norm[col, row] += norm
    return jnp.zeros((num_nodes, num_nodes), dtype=jnp.float32).at[col, row].add(norm)


def _vmem_capacity_bytes() -> int:
    try:
        return int(pltpu.get_tpu_info().vmem_capacity_bytes)
    except Exception:
        return 64 << 20  # conservative (v7x per-TensorCore)


def lightgcn_forward(x: jnp.ndarray, edge_index: jnp.ndarray,
                     num_layers: int) -> jnp.ndarray:
    """x: [N, H] float32, edge_index: [2, E] int32 -> [N, H] float32."""
    n, h = x.shape
    if num_layers == 0:
        return x

    a_norm = _build_norm_adjacency(edge_index, n).astype(jnp.bfloat16)

    # Lane-dense hidden dim; N padded to the row-tile size. Padded rows/cols
    # of A and x stay zero, so they do not perturb the mean.
    h_pad = _round_up(h, 128)
    if n <= 1024:
        n_pad = _round_up(n, 128)
        tm = n_pad                      # single fat row tile for small graphs
    else:
        tm = 512
        n_pad = _round_up(n, tm)

    a_pad = jnp.zeros((n_pad, n_pad), jnp.bfloat16).at[:n, :n].set(a_norm)
    x_pad = jnp.zeros((n_pad, h_pad), jnp.bfloat16).at[:n, :h].set(
        x.astype(jnp.bfloat16))

    # VMEM footprint: double-buffered A row tiles (bf16) + resident x input
    # (assume 2 buffers, bf16) + two bf16 ping-pong layer buffers + resident
    # f32 output block (assume 2 buffers).
    vmem_est = (2 * tm * n_pad * 2          # A tiles
                + 2 * n_pad * h_pad * 2     # x input
                + 2 * n_pad * h_pad * 2     # xb0, xb1
                + 2 * n_pad * h_pad * 4)    # output
    cap = _vmem_capacity_bytes()
    vmem_limit = min(max(int(vmem_est * 1.25) + (8 << 20), 32 << 20),
                     cap - (4 << 20))

    kernel = functools.partial(_lightgcn_kernel, tm=tm,
                               inv_count=1.0 / float(num_layers + 1))

    out = pl.pallas_call(
        kernel,
        out_shape=jax.ShapeDtypeStruct((n_pad, h_pad), jnp.float32),
        grid_spec=pltpu.PrefetchScalarGridSpec(
            num_scalar_prefetch=0,
            grid=(num_layers, n_pad // tm),
            in_specs=[
                # A_norm row tiles, streamed (re-fetched each layer).
                pl.BlockSpec((tm, n_pad), lambda l, i: (i, 0)),
                # Input embeddings, resident (constant block index).
                pl.BlockSpec((n_pad, h_pad), lambda l, i: (0, 0)),
            ],
            # Resident output block = running sum; written to HBM once.
            out_specs=pl.BlockSpec((n_pad, h_pad), lambda l, i: (0, 0)),
            scratch_shapes=[
                pltpu.VMEM((n_pad, h_pad), jnp.bfloat16),   # xb0
                pltpu.VMEM((n_pad, h_pad), jnp.bfloat16),   # xb1
            ]),
        compiler_params=pltpu.CompilerParams(
            # Layer axis is a true recurrence; row axis must stay sequential
            # because layer l+1 needs all row tiles of layer l in scratch.
            dimension_semantics=("arbitrary", "arbitrary"),
            vmem_limit_bytes=vmem_limit),
    )(a_pad, x_pad)

    return out[:n, :h].astype(x.dtype)


def _lightgcn_ref(x, edge_index, num_layers):
    """Pure-JAX f32 reference mirroring the PyTorch semantics."""
    a_norm = _build_norm_adjacency(edge_index, x.shape[0])
    embs = [x.astype(jnp.float32)]
    cur = embs[0]
    for _ in range(num_layers):
        cur = a_norm @ cur
        embs.append(cur)
    return jnp.mean(jnp.stack(embs), axis=0)


if __name__ == "__main__":
    # Small deterministic problem: 16 nodes, hidden=32, 3 LightGCN layers.
    num_nodes = 16
    hidden_size = 32
    num_layers = 3
    num_edges = 40

    key = jax.random.PRNGKey(0)
    kx, ke = jax.random.split(key)
    x = jax.random.normal(kx, (num_nodes, hidden_size), dtype=jnp.float32)
    edge_index = jax.random.randint(
        ke, (2, num_edges), minval=0, maxval=num_nodes, dtype=jnp.int32)

    out = lightgcn_forward(x, edge_index, num_layers)
    out = jax.block_until_ready(out)

    ref = _lightgcn_ref(x, edge_index, num_layers)
    assert out.shape == (num_nodes, hidden_size)
    # bf16 adjacency / embeddings on the MXU -> relaxed tolerance vs f32 ref.
    assert jnp.allclose(out, ref, atol=5e-2, rtol=5e-2), \
        float(jnp.max(jnp.abs(out - ref)))

    print("KERNEL_OK")
</pallas_src>

<mosaic_0001>
module attributes {stable_mosaic.version = 11 : i64} {
  func.func @_lightgcn_kernel(%arg0: i32, %arg1: i32, %arg2: memref<128x128xbf16, #tpu.memory_space<vmem>>, %arg3: memref<128x128xbf16, #tpu.memory_space<vmem>>, %arg4: memref<128x128xf32, #tpu.memory_space<vmem>>, %arg5: memref<128x128xbf16, #tpu.memory_space<vmem>>, %arg6: memref<128x128xbf16, #tpu.memory_space<vmem>>) attributes {dimension_semantics = [#tpu.dimension_semantics<arbitrary>, #tpu.dimension_semantics<arbitrary>], iteration_bounds = array<i64: 3, 1>, scalar_prefetch = 0 : i64, scratch_operands = 2 : i64, tpu.core_type = #tpu.core_type<tc>, window_params = [{transform_indices = @transform_0, window_bounds = array<i64: 128, 128>}, {pipeline_mode = #tpu.pipeline_mode<synchronous>, transform_indices = @transform_1, window_bounds = array<i64: 128, 128>}, {pipeline_mode = #tpu.pipeline_mode<synchronous>, transform_indices = @transform_2, window_bounds = array<i64: 128, 128>}]} {
    %c128_i32 = arith.constant 128 : i32
    %0 = arith.muli %arg1, %c128_i32 : i32
    %1 = tpu.assume_multiple %0, 128 : i32
    %c2_i32 = arith.constant 2 : i32
    %2 = arith.cmpi eq, %arg0, %c2_i32 : i32
    %c0_i32 = arith.constant 0 : i32
    %3 = arith.cmpi eq, %arg0, %c0_i32 : i32
    %4 = arith.extui %3 : i1 to i32
    %c0_i32_0 = arith.constant 0 : i32
    %5 = arith.cmpi ne, %4, %c0_i32_0 : i32
    scf.if %5 {
      %c0 = arith.constant 0 : index
      %c0_5 = arith.constant 0 : index
      %15 = vector.load %arg3[%c0, %c0_5] : memref<128x128xbf16, #tpu.memory_space<vmem>>, vector<128x128xbf16>
      %16 = arith.index_cast %1 : i32 to index
      %c0_6 = arith.constant 0 : index
      %17 = vector.load %arg3[%16, %c0_6] : memref<128x128xbf16, #tpu.memory_space<vmem>>, vector<128x128xbf16>
      %18 = arith.extf %17 : vector<128x128xbf16> to vector<128x128xf32>
      %c0_7 = arith.constant 0 : index
      %c0_8 = arith.constant 0 : index
      %19 = vector.load %arg2[%c0_7, %c0_8] : memref<128x128xbf16, #tpu.memory_space<vmem>>, vector<128x128xbf16>
      %cst = arith.constant dense<0.000000e+00> : vector<128x128xf32>
      %20 = tpu.matmul %19, %15, %cst {dimension_numbers = #tpu.dot_dimension_numbers<[1], [0], [0], [1], [0, 0, 1, 1], [], []>} : vector<128x128xbf16>, vector<128x128xbf16>, vector<128x128xf32> -> vector<128x128xf32>
      %21 = arith.addf %18, %20 : vector<128x128xf32>
      %22 = arith.extui %2 : i1 to i32
      %c0_i32_9 = arith.constant 0 : i32
      %23 = arith.cmpi ne, %22, %c0_i32_9 : i32
      scf.if %23 {
        %cst_12 = arith.constant 2.500000e-01 : f32
        %27 = vector.broadcast %cst_12 : f32 to vector<128x128xf32>
        %28 = arith.mulf %21, %27 : vector<128x128xf32>
        %29 = arith.index_cast %1 : i32 to index
        %c0_13 = arith.constant 0 : index
        %30 = vector.load %arg4[%29, %c0_13] : memref<128x128xf32, #tpu.memory_space<vmem>>, vector<128x128xf32>
        tpu.vector_store %arg4[%29, %c0_13], %28 {strides = array<i32>} : memref<128x128xf32, #tpu.memory_space<vmem>>, vector<128x128xf32>,
      } else {
      }
      %true_10 = arith.constant true
      %24 = arith.xori %2, %true_10 : i1
      %25 = arith.extui %24 : i1 to i32
      %c0_i32_11 = arith.constant 0 : i32
      %26 = arith.cmpi ne, %25, %c0_i32_11 : i32
      scf.if %26 {
        %27 = arith.truncf %20 : vector<128x128xf32> to vector<128x128xbf16>
        %28 = arith.index_cast %1 : i32 to index
        %c0_12 = arith.constant 0 : index
        %29 = vector.load %arg5[%28, %c0_12] : memref<128x128xbf16, #tpu.memory_space<vmem>>, vector<128x128xbf16>
        tpu.vector_store %arg5[%28, %c0_12], %27 {strides = array<i32>} : memref<128x128xbf16, #tpu.memory_space<vmem>>, vector<128x128xbf16>,
        %30 = arith.index_cast %1 : i32 to index
        %c0_13 = arith.constant 0 : index
        %31 = vector.load %arg4[%30, %c0_13] : memref<128x128xf32, #tpu.memory_space<vmem>>, vector<128x128xf32>
        tpu.vector_store %arg4[%30, %c0_13], %21 {strides = array<i32>} : memref<128x128xf32, #tpu.memory_space<vmem>>, vector<128x128xf32>,
      } else {
      }
    } else {
    }
    %c1_i32 = arith.constant 1 : i32
    %6 = arith.andi %arg0, %c1_i32 : i32
    %c1_i32_1 = arith.constant 1 : i32
    %7 = arith.cmpi eq, %6, %c1_i32_1 : i32
    %8 = arith.extui %7 : i1 to i32
    %c0_i32_2 = arith.constant 0 : i32
    %9 = arith.cmpi ne, %8, %c0_i32_2 : i32
    scf.if %9 {
      %c0 = arith.constant 0 : index
      %c0_5 = arith.constant 0 : index
      %15 = vector.load %arg5[%c0, %c0_5] : memref<128x128xbf16, #tpu.memory_space<vmem>>, vector<128x128xbf16>
      %16 = arith.index_cast %1 : i32 to index
      %c0_6 = arith.constant 0 : index
      %17 = vector.load %arg4[%16, %c0_6] : memref<128x128xf32, #tpu.memory_space<vmem>>, vector<128x128xf32>
      %c0_7 = arith.constant 0 : index
      %c0_8 = arith.constant 0 : index
      %18 = vector.load %arg2[%c0_7, %c0_8] : memref<128x128xbf16, #tpu.memory_space<vmem>>, vector<128x128xbf16>
      %cst = arith.constant dense<0.000000e+00> : vector<128x128xf32>
      %19 = tpu.matmul %18, %15, %cst {dimension_numbers = #tpu.dot_dimension_numbers<[1], [0], [0], [1], [0, 0, 1, 1], [], []>} : vector<128x128xbf16>, vector<128x128xbf16>, vector<128x128xf32> -> vector<128x128xf32>
      %20 = arith.addf %17, %19 : vector<128x128xf32>
      %21 = arith.extui %2 : i1 to i32
      %c0_i32_9 = arith.constant 0 : i32
      %22 = arith.cmpi ne, %21, %c0_i32_9 : i32
      scf.if %22 {
        %cst_12 = arith.constant 2.500000e-01 : f32
        %26 = vector.broadcast %cst_12 : f32 to vector<128x128xf32>
        %27 = arith.mulf %20, %26 : vector<128x128xf32>
        %28 = arith.index_cast %1 : i32 to index
        %c0_13 = arith.constant 0 : index
        %29 = vector.load %arg4[%28, %c0_13] : memref<128x128xf32, #tpu.memory_space<vmem>>, vector<128x128xf32>
        tpu.vector_store %arg4[%28, %c0_13], %27 {strides = array<i32>} : memref<128x128xf32, #tpu.memory_space<vmem>>, vector<128x128xf32>,
      } else {
      }
      %true_10 = arith.constant true
      %23 = arith.xori %2, %true_10 : i1
      %24 = arith.extui %23 : i1 to i32
      %c0_i32_11 = arith.constant 0 : i32
      %25 = arith.cmpi ne, %24, %c0_i32_11 : i32
      scf.if %25 {
        %26 = arith.truncf %19 : vector<128x128xf32> to vector<128x128xbf16>
        %27 = arith.index_cast %1 : i32 to index
        %c0_12 = arith.constant 0 : index
        %28 = vector.load %arg6[%27, %c0_12] : memref<128x128xbf16, #tpu.memory_space<vmem>>, vector<128x128xbf16>
        tpu.vector_store %arg6[%27, %c0_12], %26 {strides = array<i32>} : memref<128x128xbf16, #tpu.memory_space<vmem>>, vector<128x128xbf16>,
        %29 = arith.index_cast %1 : i32 to index
        %c0_13 = arith.constant 0 : index
        %30 = vector.load %arg4[%29, %c0_13] : memref<128x128xf32, #tpu.memory_space<vmem>>, vector<128x128xf32>
        tpu.vector_store %arg4[%29, %c0_13], %20 {strides = array<i32>} : memref<128x128xf32, #tpu.memory_space<vmem>>, vector<128x128xf32>,
      } else {
      }
    } else {
    }
    %c0_i32_3 = arith.constant 0 : i32
    %10 = arith.cmpi sgt, %arg0, %c0_i32_3 : i32
    %true = arith.constant true
    %11 = arith.xori %7, %true : i1
    %12 = arith.andi %10, %11 : i1
    %13 = arith.extui %12 : i1 to i32
    %c0_i32_4 = arith.constant 0 : i32
    %14 = arith.cmpi ne, %13, %c0_i32_4 : i32
    scf.if %14 {
      %c0 = arith.constant 0 : index
      %c0_5 = arith.constant 0 : index
      %15 = vector.load %arg6[%c0, %c0_5] : memref<128x128xbf16, #tpu.memory_space<vmem>>, vector<128x128xbf16>
      %16 = arith.index_cast %1 : i32 to index
      %c0_6 = arith.constant 0 : index
      %17 = vector.load %arg4[%16, %c0_6] : memref<128x128xf32, #tpu.memory_space<vmem>>, vector<128x128xf32>
      %c0_7 = arith.constant 0 : index
      %c0_8 = arith.constant 0 : index
      %18 = vector.load %arg2[%c0_7, %c0_8] : memref<128x128xbf16, #tpu.memory_space<vmem>>, vector<128x128xbf16>
      %cst = arith.constant dense<0.000000e+00> : vector<128x128xf32>
      %19 = tpu.matmul %18, %15, %cst {dimension_numbers = #tpu.dot_dimension_numbers<[1], [0], [0], [1], [0, 0, 1, 1], [], []>} : vector<128x128xbf16>, vector<128x128xbf16>, vector<128x128xf32> -> vector<128x128xf32>
      %20 = arith.addf %17, %19 : vector<128x128xf32>
      %21 = arith.extui %2 : i1 to i32
      %c0_i32_9 = arith.constant 0 : i32
      %22 = arith.cmpi ne, %21, %c0_i32_9 : i32
      scf.if %22 {
        %cst_12 = arith.constant 2.500000e-01 : f32
        %26 = vector.broadcast %cst_12 : f32 to vector<128x128xf32>
        %27 = arith.mulf %20, %26 : vector<128x128xf32>
        %28 = arith.index_cast %1 : i32 to index
        %c0_13 = arith.constant 0 : index
        %29 = vector.load %arg4[%28, %c0_13] : memref<128x128xf32, #tpu.memory_space<vmem>>, vector<128x128xf32>
        tpu.vector_store %arg4[%28, %c0_13], %27 {strides = array<i32>} : memref<128x128xf32, #tpu.memory_space<vmem>>, vector<128x128xf32>,
      } else {
      }
      %true_10 = arith.constant true
      %23 = arith.xori %2, %true_10 : i1
      %24 = arith.extui %23 : i1 to i32
      %c0_i32_11 = arith.constant 0 : i32
      %25 = arith.cmpi ne, %24, %c0_i32_11 : i32
      scf.if %25 {
        %26 = arith.truncf %19 : vector<128x128xf32> to vector<128x128xbf16>
        %27 = arith.index_cast %1 : i32 to index
        %c0_12 = arith.constant 0 : index
        %28 = vector.load %arg5[%27, %c0_12] : memref<128x128xbf16, #tpu.memory_space<vmem>>, vector<128x128xbf16>
        tpu.vector_store %arg5[%27, %c0_12], %26 {strides = array<i32>} : memref<128x128xbf16, #tpu.memory_space<vmem>>, vector<128x128xbf16>,
        %29 = arith.index_cast %1 : i32 to index
        %c0_13 = arith.constant 0 : index
        %30 = vector.load %arg4[%29, %c0_13] : memref<128x128xf32, #tpu.memory_space<vmem>>, vector<128x128xf32>
        tpu.vector_store %arg4[%29, %c0_13], %20 {strides = array<i32>} : memref<128x128xf32, #tpu.memory_space<vmem>>, vector<128x128xf32>,
      } else {
      }
    } else {
    }
    return
  }
  func.func @transform_0(%arg0: i32, %arg1: i32) -> (i32, i32) {
    %c0_i32 = arith.constant 0 : i32
    %c0_i32_0 = arith.constant 0 : i32
    return %arg1, %c0_i32 : i32, i32
  }
  func.func @transform_1(%arg0: i32, %arg1: i32) -> (i32, i32) {
    %c0_i32 = arith.constant 0 : i32
    %c0_i32_0 = arith.constant 0 : i32
    %c0_i32_1 = arith.constant 0 : i32
    return %c0_i32, %c0_i32_0 : i32, i32
  }
  func.func @transform_2(%arg0: i32, %arg1: i32) -> (i32, i32) {
    %c0_i32 = arith.constant 0 : i32
    %c0_i32_0 = arith.constant 0 : i32
    %c0_i32_1 = arith.constant 0 : i32
    return %c0_i32, %c0_i32_0 : i32, i32
  }
}

</mosaic_0001>

<llo_original>
// kernel: tpu_custom_call.1
$region0: #{tpu_custom_call.1}
  #allocation0 [shape = 'u32[]', space=smem, size = 0x4, offset = 0x4, fixed_abs, tag = 'smem constant byte address 0x4 - core index']
  #allocation1 [shape = 'u32[144,128]{1,0:T(1,128)}', space=vmem, size = 0x12000, scoped, tag = 'internal scratch']
  #allocation2 [shape = 'bf16[128,128]{1,0:T(8,128)(2,1)}', space=vmem, size = 0x8000, scoped, tag = 'scratch operand']
  #allocation3 [shape = 'bf16[128,128]{1,0:T(8,128)(2,1)}', space=vmem, size = 0x8000, scoped, tag = 'scratch operand']
  %s0 = inlined_call_operand.hbm [shape: bf16[128,128], index: 0, kind: input, shape index: {}]
  %s1 = inlined_call_operand.hbm [shape: bf16[128,128], index: 1, kind: input, shape index: {}]
  %s2 = inlined_call_operand.hbm [shape: f32[128,128], index: 2, kind: output, shape index: {}]
  %s3 = sld [smem:[#allocation0]]
  $region85: #{tpu_custom_call.1} parent=0
    _
  %s5 = ssub.s32 1, %s3
  %s6 = scalar_select 0, %s5, %s3
  $region1: #{tpu_custom_call.1} parent=0
    #allocation4 [shape = 'u8[32768]{0}', space=vmem, size = 0x8000, scoped, tag = 'input window, operand 0, single buffered']
    #allocation5 [shape = 's32[2]{0}', space=sflag, size = 0x8, scoped, tag = 'scoped memory for tpu_custom_call.1']
    #allocation6 [shape = 's32[2]{0}', space=sflag, size = 0x8, scoped, tag = 'scoped memory for tpu_custom_call.1']
    #allocation7 [shape = 'u8[32768]{0}', space=vmem, size = 0x8000, scoped, tag = 'input window, operand 1, single buffered']
    #allocation8 [shape = 's32[1]{0}', space=sflag, size = 0x4, scoped, tag = 'scoped memory for tpu_custom_call.1']
    #allocation9 [shape = 'u8[65536]{0}', space=vmem, size = 0x10000, scoped, tag = 'output window, operand 0, single buffered']
    %7 = vsyncpa [#allocation5], 0
    %8 = vsyncpa [#allocation8], 0
    %9 = vsyncpa [#allocation6], 0
    loop: start=0, step=1, limit=5
    $region2: #{tpu_custom_call.1} parent=1 // loop_pre_header
      _
    $region3: #{tpu_custom_call.1} parent=1 // loop_header
      %s11 = sphi 0, %s15
      %p12 = scmp.ge.s32.totalorder %s11, 5
      %s18 = sphi 0, %s30
      %s19 = sphi 0, %s26
      %s20 = sphi 0, %s18
      %s21 = sphi 0, %s19
      %s22 = sphi 0, %s20
      %s23 = sphi 0, %s21
      %s33 = sphi 0, %s35
      %s36 = sphi 0, %s33
      %s37 = sphi 0, %s36
      %s53 = sphi 0, %s37
      %s57 = sphi 0, %s57
      %s59 = sphi 0, %s57
      %s60 = sphi 0, %s59
      %s74 = sphi 0, %s60
      %s78 = sphi 0, %s78
      %s80 = sphi 0, %s78
      %s81 = sphi 0, %s80
      %s95 = sphi 0, %s81
    $region4: #{tpu_custom_call.1} parent=1 // loop_header_branch
      %14 = sbr.rel (%p12) target = $region8
    $region5: #{tpu_custom_call.1} parent=1 // loop_body
      %s16 = ssub.s32 %s11, 1
      %s17 = ssub.s32 %s11, 2
      %s24 = sadd.s32 1, %s19
      %p25 = scmp.ge.s32.totalorder %s24, 1
      %s26 = scalar_select %p25, 0, %s24
      %s27 = sadd.s32 1, %s18
      %s28 = scalar_select %p25, %s27, %s18
      %p29 = scmp.ge.s32.totalorder %s28, 3
      %s30 = scalar_select %p29, 0, %s28
      %s31 = ssub.s32 %s19, %s26
      %p32 = scmp.eq.s32.totalorder %s31, 0
      %s34 = sadd.s32 %s33, 1
      %s35 = scalar_select %p32, %s33, %s34
      %p38 = pneg %p32
      %p39 = scmp.eq.s32.totalorder %s11, 2
      %p40 = por %p38, %p39
      %p41 = scmp.ne.s32.totalorder %s33, %s36
      %p42 = scmp.eq.s32.totalorder %s11, 0
      %p43 = por %p41, %p42
      %p44 = scmp.ne.s32.totalorder %s33, %s36
      %p45 = scmp.eq.s32.totalorder %s16, 2
      %p46 = por %p44, %p45
      %p47 = scmp.ne.s32.totalorder %s36, %s37
      %p48 = scmp.eq.s32.totalorder %s16, 0
      %p49 = por %p47, %p48
      %p50 = scmp.ne.s32.totalorder %s36, %s37
      %p51 = scmp.eq.s32.totalorder %s17, 2
      %p52 = por %p50, %p51
      %p54 = scmp.ne.s32.totalorder %s37, %s53
      %p55 = scmp.eq.s32.totalorder %s17, 0
      %p56 = por %p54, %p55
      %s58 = sadd.s32 %s57, 1
      %p61 = scmp.eq.s32.totalorder %s11, 2
      %p62 = scmp.ne.s32.totalorder %s57, %s59
      %p63 = scmp.eq.s32.totalorder %s11, 0
      %p64 = por %p62, %p63
      %p65 = scmp.ne.s32.totalorder %s57, %s59
      %p66 = scmp.eq.s32.totalorder %s16, 2
      %p67 = por %p65, %p66
      %p68 = scmp.ne.s32.totalorder %s59, %s60
      %p69 = scmp.eq.s32.totalorder %s16, 0
      %p70 = por %p68, %p69
      %p71 = scmp.ne.s32.totalorder %s59, %s60
      %p72 = scmp.eq.s32.totalorder %s17, 2
      %p73 = por %p71, %p72
      %p75 = scmp.ne.s32.totalorder %s60, %s74
      %p76 = scmp.eq.s32.totalorder %s17, 0
      %p77 = por %p75, %p76
      %s79 = sadd.s32 %s78, 1
      %p82 = scmp.eq.s32.totalorder %s11, 2
      %p83 = scmp.ne.s32.totalorder %s78, %s80
      %p84 = scmp.eq.s32.totalorder %s11, 0
      %p85 = por %p83, %p84
      %p86 = scmp.ne.s32.totalorder %s78, %s80
      %p87 = scmp.eq.s32.totalorder %s16, 2
      %p88 = por %p86, %p87
      %p89 = scmp.ne.s32.totalorder %s80, %s81
      %p90 = scmp.eq.s32.totalorder %s16, 0
      %p91 = por %p89, %p90
      %p92 = scmp.ne.s32.totalorder %s80, %s81
      %p93 = scmp.eq.s32.totalorder %s17, 2
      %p94 = por %p92, %p93
      %p96 = scmp.ne.s32.totalorder %s81, %s95
      %p97 = scmp.eq.s32.totalorder %s17, 0
      %p98 = por %p96, %p97
      %p99 = scmp.le.s32.totalorder 1, %s11
      %p100 = scmp.lt.s32.totalorder %s11, 4
      %p101 = pnand %p99, %p100
      %p102 = pneg %p101
      // Predicated region
      $region9: #{tpu_custom_call.1} parent=5 // pred_check
        _
      $region10: #{tpu_custom_call.1} parent=5 // pred_check_branch
        %104 = sbr.rel (%p101) target = $region12
      $region11: #{tpu_custom_call.1} parent=5 // pred_region
        %s105 = ssub.s32 %s11, 1
        // Predicated region
        $region13: #{tpu_custom_call.1} parent=11 // pred_check
          %p106 = pneg %p49
        $region14: #{tpu_custom_call.1} parent=11 // pred_check_branch
          %108 = sbr.rel (%p106) target = $region16
        $region15: #{tpu_custom_call.1} parent=11 // pred_region
          %s109 = smul.u32 16, %s21
          %s111 = ssub.s32 1024, 1024
          %112 = vsyncadd [#allocation5], %s111
          %s113 = smul.addr %s109, 64
          %s114 = scalar_lea.hbm %s0, %s113
          %s115 = sshll.u32 [#allocation4], 4
          %s116 = int_to_ptr.vmem [resolvable:$true] %s115
          %121 = dma.hbm_to_vmem [thread:$0]  %s114, 1024, %s116, [#allocation5], 64, 64, 4
        $region16: #{tpu_custom_call.1} parent=11 // pred_fallthru
          _
        // Predicated region
        $region17: #{tpu_custom_call.1} parent=11 // pred_check
          %p122 = pneg %p70
        $region18: #{tpu_custom_call.1} parent=11 // pred_check_branch
          %124 = sbr.rel (%p122) target = $region20
        $region19: #{tpu_custom_call.1} parent=11 // pred_region
          %s126 = ssub.s32 1024, 1024
          %127 = vsyncadd [#allocation8], %s126
          %s128 = sshll.u32 [#allocation7], 4
          %s129 = int_to_ptr.vmem [resolvable:$true] %s128
          %134 = dma.hbm_to_vmem [thread:$0]  %s1, 1024, %s129, [#allocation8], 64, 64, 4
        $region20: #{tpu_custom_call.1} parent=11 // pred_fallthru
          _
      $region12: #{tpu_custom_call.1} parent=5 // pred_fallthru
        _
      %p135 = scmp.lt.s32.totalorder %s11, 3
      // Predicated region
      $region21: #{tpu_custom_call.1} parent=5 // pred_check
        %p136 = pneg %p135
      $region22: #{tpu_custom_call.1} parent=5 // pred_check_branch
        %138 = sbr.rel (%p136) target = $region24
      $region23: #{tpu_custom_call.1} parent=5 // pred_region
        _
      $region24: #{tpu_custom_call.1} parent=5 // pred_fallthru
        _
      %p139 = scmp.le.s32.totalorder 1, %s11
      %p140 = scmp.lt.s32.totalorder %s11, 4
      %p141 = pnand %p139, %p140
      %p142 = pneg %p141
      // Predicated region
      $region25: #{tpu_custom_call.1} parent=5 // pred_check
        _
      $region26: #{tpu_custom_call.1} parent=5 // pred_check_branch
        %144 = sbr.rel (%p141) target = $region28
      $region27: #{tpu_custom_call.1} parent=5 // pred_region
        %s145 = ssub.s32 %s11, 1
        // Predicated region
        $region29: #{tpu_custom_call.1} parent=27 // pred_check
          %p146 = pneg %p49
        $region30: #{tpu_custom_call.1} parent=27 // pred_check_branch
          %148 = sbr.rel (%p146) target = $region32
        $region31: #{tpu_custom_call.1} parent=27 // pred_region
          %149 = dma.done [#allocation5], 1024
        $region32: #{tpu_custom_call.1} parent=27 // pred_fallthru
          _
        // Predicated region
        $region33: #{tpu_custom_call.1} parent=27 // pred_check
          %p150 = pneg %p70
        $region34: #{tpu_custom_call.1} parent=27 // pred_check_branch
          %152 = sbr.rel (%p150) target = $region36
        $region35: #{tpu_custom_call.1} parent=27 // pred_region
          %153 = dma.done [#allocation8], 1024
        $region36: #{tpu_custom_call.1} parent=27 // pred_fallthru
          _
        %p154 = pneg %p49
        %p155 = pneg %p46
        %p156 = pneg %p70
        %p157 = pneg %p67
        %p158 = pneg %p91
        %p159 = pneg %p88
        %s160 = smul.u32 16, %s21
        %s162 = smul.u32 %s21, 128
        %p163 = scmp.eq.s32.totalorder %s20, 2
        %p164 = scmp.eq.s32.totalorder %s20, 0
        // Predicated region
        $region37: #{tpu_custom_call.1} parent=27 // pred_check
          %p165 = pneg %p164
        $region38: #{tpu_custom_call.1} parent=27 // pred_check_branch
          %167 = sbr.rel (%p165) target = $region40
        $region39: #{tpu_custom_call.1} parent=27 // pred_region
          %v168 = vld [vmem:[#allocation7] sm:$0xf]
          %v169 = vld [vmem:[#allocation7 + $0x4] sm:$0xf]
          %v170 = vld [vmem:[#allocation7 + $0x8] sm:$0xf]
          %v171 = vld [vmem:[#allocation7 + $0xc] sm:$0xf]
          %v172 = vld [vmem:[#allocation7 + $0x10] sm:$0xf]
          %v173 = vld [vmem:[#allocation7 + $0x14] sm:$0xf]
          %v174 = vld [vmem:[#allocation7 + $0x18] sm:$0xf]
          %v175 = vld [vmem:[#allocation7 + $0x1c] sm:$0xf]
          %v176 = vld [vmem:[#allocation7 + $0x20] sm:$0xf]
          %v177 = vld [vmem:[#allocation7 + $0x24] sm:$0xf]
          %v178 = vld [vmem:[#allocation7 + $0x28] sm:$0xf]
          %v179 = vld [vmem:[#allocation7 + $0x2c] sm:$0xf]
          %v180 = vld [vmem:[#allocation7 + $0x30] sm:$0xf]
          %v181 = vld [vmem:[#allocation7 + $0x34] sm:$0xf]
          %v182 = vld [vmem:[#allocation7 + $0x38] sm:$0xf]
          %v183 = vld [vmem:[#allocation7 + $0x3c] sm:$0xf]
          %s184 = sshra.s32 %s162, 3
          %s185 = sand.u32 %s162, 7
          %s186 = smul.addr %s184, 4
          %s187 = scalar_lea.vmem [#allocation7], %s186
          %v188 = vld [vmem:[%s187] sm:$0xf]
          %v189 = vld [vmem:[%s187 + $0x4] sm:$0xf]
          %v190 = vld [vmem:[%s187 + $0x8] sm:$0xf]
          %v191 = vld [vmem:[%s187 + $0xc] sm:$0xf]
          %v192 = vld [vmem:[%s187 + $0x10] sm:$0xf]
          %v193 = vld [vmem:[%s187 + $0x14] sm:$0xf]
          %v194 = vld [vmem:[%s187 + $0x18] sm:$0xf]
          %v195 = vld [vmem:[%s187 + $0x1c] sm:$0xf]
          %v196 = vld [vmem:[%s187 + $0x20] sm:$0xf]
          %v197 = vld [vmem:[%s187 + $0x24] sm:$0xf]
          %v198 = vld [vmem:[%s187 + $0x28] sm:$0xf]
          %v199 = vld [vmem:[%s187 + $0x2c] sm:$0xf]
          %v200 = vld [vmem:[%s187 + $0x30] sm:$0xf]
          %v201 = vld [vmem:[%s187 + $0x34] sm:$0xf]
          %v202 = vld [vmem:[%s187 + $0x38] sm:$0xf]
          %v203 = vld [vmem:[%s187 + $0x3c] sm:$0xf]
          %v204 = vunpack.c.l.bf16 %v188
          %v205 = vunpack.c.l.bf16 %v189
          %v206 = vunpack.c.l.bf16 %v190
          %v207 = vunpack.c.l.bf16 %v191
          %v208 = vunpack.c.l.bf16 %v192
          %v209 = vunpack.c.l.bf16 %v193
          %v210 = vunpack.c.l.bf16 %v194
          %v211 = vunpack.c.l.bf16 %v195
          %v212 = vunpack.c.l.bf16 %v196
          %v213 = vunpack.c.l.bf16 %v197
          %v214 = vunpack.c.l.bf16 %v198
          %v215 = vunpack.c.l.bf16 %v199
          %v216 = vunpack.c.l.bf16 %v200
          %v217 = vunpack.c.l.bf16 %v201
          %v218 = vunpack.c.l.bf16 %v202
          %v219 = vunpack.c.l.bf16 %v203
          %v220 = vld [vmem:[#allocation4] sm:$0xf]
          %v221 = vld [vmem:[#allocation4 + $0x4] sm:$0xf]
          %v222 = vld [vmem:[#allocation4 + $0x8] sm:$0xf]
          %v223 = vld [vmem:[#allocation4 + $0xc] sm:$0xf]
          %v224 = vld [vmem:[#allocation4 + $0x10] sm:$0xf]
          %v225 = vld [vmem:[#allocation4 + $0x14] sm:$0xf]
          %v226 = vld [vmem:[#allocation4 + $0x18] sm:$0xf]
          %v227 = vld [vmem:[#allocation4 + $0x1c] sm:$0xf]
          %v228 = vld [vmem:[#allocation4 + $0x20] sm:$0xf]
          %v229 = vld [vmem:[#allocation4 + $0x24] sm:$0xf]
          %v230 = vld [vmem:[#allocation4 + $0x28] sm:$0xf]
          %v231 = vld [vmem:[#allocation4 + $0x2c] sm:$0xf]
          %v232 = vld [vmem:[#allocation4 + $0x30] sm:$0xf]
          %v233 = vld [vmem:[#allocation4 + $0x34] sm:$0xf]
          %v234 = vld [vmem:[#allocation4 + $0x38] sm:$0xf]
          %v235 = vld [vmem:[#allocation4 + $0x3c] sm:$0xf]
          %v252 = vunpack.c.l.b16 %v220
          %v253 = vunpack.c.l.b16 %v221
          %v254 = vunpack.c.l.b16 %v222
          %v255 = vunpack.c.l.b16 %v223
          %v256 = vunpack.c.l.b16 %v224
          %v257 = vunpack.c.l.b16 %v225
          %v258 = vunpack.c.l.b16 %v226
          %v259 = vunpack.c.l.b16 %v227
          %v260 = vunpack.c.l.b16 %v228
          %v261 = vunpack.c.l.b16 %v229
          %v262 = vunpack.c.l.b16 %v230
          %v263 = vunpack.c.l.b16 %v231
          %v264 = vunpack.c.l.b16 %v232
          %v265 = vunpack.c.l.b16 %v233
          %v266 = vunpack.c.l.b16 %v234
          %v267 = vunpack.c.l.b16 %v235
          %v268 = vpack.c.b16 %v253, %v252
          %v269 = vpack.c.b16 %v255, %v254
          %v270 = vpack.c.b16 %v257, %v256
          %v271 = vpack.c.b16 %v259, %v258
          %v272 = vpack.c.b16 %v261, %v260
          %v273 = vpack.c.b16 %v263, %v262
          %v274 = vpack.c.b16 %v265, %v264
          %v275 = vpack.c.b16 %v267, %v266
          %v300 = vunpack.c.l.b16 %v168
          %v301 = vunpack.c.l.b16 %v169
          %v302 = vunpack.c.l.b16 %v170
          %v303 = vunpack.c.l.b16 %v171
          %v304 = vunpack.c.l.b16 %v172
          %v305 = vunpack.c.l.b16 %v173
          %v306 = vunpack.c.l.b16 %v174
          %v307 = vunpack.c.l.b16 %v175
          %v308 = vunpack.c.l.b16 %v176
          %v309 = vunpack.c.l.b16 %v177
          %v310 = vunpack.c.l.b16 %v178
          %v311 = vunpack.c.l.b16 %v179
          %v312 = vunpack.c.l.b16 %v180
          %v313 = vunpack.c.l.b16 %v181
          %v314 = vunpack.c.l.b16 %v182
          %v315 = vunpack.c.l.b16 %v183
          %v316 = vpack.c.b16 %v301, %v300
          %v317 = vpack.c.b16 %v303, %v302
          %v318 = vpack.c.b16 %v305, %v304
          %v319 = vpack.c.b16 %v307, %v306
          %v320 = vpack.c.b16 %v309, %v308
          %v321 = vpack.c.b16 %v311, %v310
          %v322 = vpack.c.b16 %v313, %v312
          %v323 = vpack.c.b16 %v315, %v314
          %332 = vmatprep.subr.bf16.mxu0 0
          %333 = vmatpush1.bf16.msra.mxu0 %v323
          %334 = vmatprep.subr.bf16.mxu0 0
          %335 = vmatpush1.bf16.msra.mxu0 %v322
          %336 = vmatprep.subr.bf16.mxu0 0
          %337 = vmatpush1.bf16.msra.mxu0 %v321
          %338 = vmatprep.subr.bf16.mxu0 0
          %339 = vmatpush1.bf16.msra.mxu0 %v320
          %340 = vmatprep.subr.bf16.mxu0 0
          %341 = vmatpush1.bf16.msra.mxu0 %v319
          %342 = vmatprep.subr.bf16.mxu0 0
          %343 = vmatpush1.bf16.msra.mxu0 %v318
          %344 = vmatprep.subr.bf16.mxu0 0
          %345 = vmatpush1.bf16.msra.mxu0 %v317
          %346 = vmatprep.subr.bf16.mxu0 0
          %347 = vmatpush1.bf16.msra.mxu0 %v316
          %348 = vmatprep.subr.bf16.mxu0 0
          %349 = vmatpush2.bf16.msra.mxu0 0
          %350 = vmatprep.subr.bf16.mxu0 0
          %351 = vmatpush2.bf16.msra.mxu0 0
          %352 = vmatprep.subr.bf16.mxu0 0
          %353 = vmatpush2.bf16.msra.mxu0 0
          %354 = vmatprep.subr.bf16.mxu0 0
          %355 = vmatpush2.bf16.msra.mxu0 0
          %356 = vmatprep.subr.bf16.mxu0 0
          %357 = vmatpush2.bf16.msra.mxu0 0
          %358 = vmatprep.subr.bf16.mxu0 0
          %359 = vmatpush2.bf16.msra.mxu0 0
          %360 = vmatprep.subr.bf16.mxu0 0
          %361 = vmatpush2.bf16.msra.mxu0 0
          %362 = vmatprep.subr.bf16.mxu0 0
          %363 = vmatpush2.bf16.msra.mxu0 0
          %364 = vmatprep.mubr.bf16.mxu0 0
          %365 = vmatmul.mubr.bf16.gmra.mxu0 %v268
          %v366 = vpop.f32.mrf.mxu0
          %v367 = vadd.f32 0.0, %v366
          %v368 = vpop.f32.mrf.mxu0
          %v369 = vpop.f32.mrf.mxu0
          %v370 = vadd.f32 0.0, %v369
          %v371 = vpop.f32.mrf.mxu0
          %372 = vmatprep.mubr.bf16.mxu0 0
          %373 = vmatmul.mubr.bf16.gmra.mxu0 %v269
          %v374 = vpop.f32.mrf.mxu0
          %v375 = vadd.f32 0.0, %v374
          %v376 = vpop.f32.mrf.mxu0
          %v377 = vpop.f32.mrf.mxu0
          %v378 = vadd.f32 0.0, %v377
          %v379 = vpop.f32.mrf.mxu0
          %380 = vmatprep.mubr.bf16.mxu0 0
          %381 = vmatmul.mubr.bf16.gmra.mxu0 %v270
          %v382 = vpop.f32.mrf.mxu0
          %v383 = vadd.f32 0.0, %v382
          %v384 = vpop.f32.mrf.mxu0
          %v385 = vpop.f32.mrf.mxu0
          %v386 = vadd.f32 0.0, %v385
          %v387 = vpop.f32.mrf.mxu0
          %388 = vmatprep.mubr.bf16.mxu0 0
          %389 = vmatmul.mubr.bf16.gmra.mxu0 %v271
          %v390 = vpop.f32.mrf.mxu0
          %v391 = vadd.f32 0.0, %v390
          %v392 = vpop.f32.mrf.mxu0
          %v393 = vpop.f32.mrf.mxu0
          %v394 = vadd.f32 0.0, %v393
          %v395 = vpop.f32.mrf.mxu0
          %396 = vmatprep.mubr.bf16.mxu0 0
          %397 = vmatmul.mubr.bf16.gmra.mxu0 %v272
          %v398 = vpop.f32.mrf.mxu0
          %v399 = vadd.f32 0.0, %v398
          %v400 = vpop.f32.mrf.mxu0
          %v401 = vpop.f32.mrf.mxu0
          %v402 = vadd.f32 0.0, %v401
          %v403 = vpop.f32.mrf.mxu0
          %404 = vmatprep.mubr.bf16.mxu0 0
          %405 = vmatmul.mubr.bf16.gmra.mxu0 %v273
          %v406 = vpop.f32.mrf.mxu0
          %v407 = vadd.f32 0.0, %v406
          %v408 = vpop.f32.mrf.mxu0
          %v409 = vpop.f32.mrf.mxu0
          %v410 = vadd.f32 0.0, %v409
          %v411 = vpop.f32.mrf.mxu0
          %412 = vmatprep.mubr.bf16.mxu0 0
          %413 = vmatmul.mubr.bf16.gmra.mxu0 %v274
          %v414 = vpop.f32.mrf.mxu0
          %v415 = vadd.f32 0.0, %v414
          %v416 = vpop.f32.mrf.mxu0
          %v417 = vpop.f32.mrf.mxu0
          %v418 = vadd.f32 0.0, %v417
          %v419 = vpop.f32.mrf.mxu0
          %420 = vmatprep.mubr.bf16.mxu0 0
          %421 = vmatmul.mubr.bf16.gmra.mxu0 %v275
          %v422 = vpop.f32.mrf.mxu0
          %v423 = vadd.f32 0.0, %v422
          %v424 = vpop.f32.mrf.mxu0
          %v425 = vpop.f32.mrf.mxu0
          %v426 = vadd.f32 0.0, %v425
          %v427 = vpop.f32.mrf.mxu0
          %428 = vdwg.mxu0
          %v429 = vadd.f32 %v204, %v367
          %v430 = vadd.f32 %v205, %v370
          %v431 = vadd.f32 %v206, %v375
          %v432 = vadd.f32 %v207, %v378
          %v433 = vadd.f32 %v208, %v383
          %v434 = vadd.f32 %v209, %v386
          %v435 = vadd.f32 %v210, %v391
          %v436 = vadd.f32 %v211, %v394
          %v437 = vadd.f32 %v212, %v399
          %v438 = vadd.f32 %v213, %v402
          %v439 = vadd.f32 %v214, %v407
          %v440 = vadd.f32 %v215, %v410
          %v441 = vadd.f32 %v216, %v415
          %v442 = vadd.f32 %v217, %v418
          %v443 = vadd.f32 %v218, %v423
          %v444 = vadd.f32 %v219, %v426
          // Predicated region
          $region41: #{tpu_custom_call.1} parent=39 // pred_check
            %p445 = pneg %p163
          $region42: #{tpu_custom_call.1} parent=39 // pred_check_branch
            %447 = sbr.rel (%p445) target = $region44
          $region43: #{tpu_custom_call.1} parent=39 // pred_region
            %v448 = vmul.f32 %v429, 0.25
            %v449 = vmul.f32 %v430, 0.25
            %v450 = vmul.f32 %v431, 0.25
            %v451 = vmul.f32 %v432, 0.25
            %v452 = vmul.f32 %v433, 0.25
            %v453 = vmul.f32 %v434, 0.25
            %v454 = vmul.f32 %v435, 0.25
            %v455 = vmul.f32 %v436, 0.25
            %v456 = vmul.f32 %v437, 0.25
            %v457 = vmul.f32 %v438, 0.25
            %v458 = vmul.f32 %v439, 0.25
            %v459 = vmul.f32 %v440, 0.25
            %v460 = vmul.f32 %v441, 0.25
            %v461 = vmul.f32 %v442, 0.25
            %v462 = vmul.f32 %v443, 0.25
            %v463 = vmul.f32 %v444, 0.25
            %s464 = scalar_lea.vmem [#allocation9], %s162
            %465 = vst [vmem:[%s464] sm:$0xff] %v448
            %466 = vst [vmem:[%s464 + $0x8] sm:$0xff] %v449
            %467 = vst [vmem:[%s464 + $0x10] sm:$0xff] %v450
            %468 = vst [vmem:[%s464 + $0x18] sm:$0xff] %v451
            %469 = vst [vmem:[%s464 + $0x20] sm:$0xff] %v452
            %470 = vst [vmem:[%s464 + $0x28] sm:$0xff] %v453
            %471 = vst [vmem:[%s464 + $0x30] sm:$0xff] %v454
            %472 = vst [vmem:[%s464 + $0x38] sm:$0xff] %v455
            %473 = vst [vmem:[%s464 + $0x40] sm:$0xff] %v456
            %474 = vst [vmem:[%s464 + $0x48] sm:$0xff] %v457
            %475 = vst [vmem:[%s464 + $0x50] sm:$0xff] %v458
            %476 = vst [vmem:[%s464 + $0x58] sm:$0xff] %v459
            %477 = vst [vmem:[%s464 + $0x60] sm:$0xff] %v460
            %478 = vst [vmem:[%s464 + $0x68] sm:$0xff] %v461
            %479 = vst [vmem:[%s464 + $0x70] sm:$0xff] %v462
            %480 = vst [vmem:[%s464 + $0x78] sm:$0xff] %v463
          $region44: #{tpu_custom_call.1} parent=39 // pred_fallthru
            _
          %p481 = scmp.ne.s32.totalorder %s20, 2
          // Predicated region
          $region45: #{tpu_custom_call.1} parent=39 // pred_check
            %p482 = pneg %p481
          $region46: #{tpu_custom_call.1} parent=39 // pred_check_branch
            %484 = sbr.rel (%p482) target = $region48
          $region47: #{tpu_custom_call.1} parent=39 // pred_region
            %v485 = vpack.c.bf16 %v370, %v367
            %v486 = vpack.c.bf16 %v378, %v375
            %v487 = vpack.c.bf16 %v386, %v383
            %v488 = vpack.c.bf16 %v394, %v391
            %v489 = vpack.c.bf16 %v402, %v399
            %v490 = vpack.c.bf16 %v410, %v407
            %v491 = vpack.c.bf16 %v418, %v415
            %v492 = vpack.c.bf16 %v426, %v423
            %v501 = vunpack.c.l.b16 %v485
            %v502 = vunpack.c.h.b16 %v485
            %v503 = vunpack.c.l.b16 %v486
            %v504 = vunpack.c.h.b16 %v486
            %v505 = vunpack.c.l.b16 %v487
            %v506 = vunpack.c.h.b16 %v487
            %v507 = vunpack.c.l.b16 %v488
            %v508 = vunpack.c.h.b16 %v488
            %v509 = vunpack.c.l.b16 %v489
            %v510 = vunpack.c.h.b16 %v489
            %v511 = vunpack.c.l.b16 %v490
            %v512 = vunpack.c.h.b16 %v490
            %v513 = vunpack.c.l.b16 %v491
            %v514 = vunpack.c.h.b16 %v491
            %v515 = vunpack.c.l.b16 %v492
            %v516 = vunpack.c.h.b16 %v492
            %v517 = vpack.c.b16 %v501, %v501
            %v518 = vpack.c.b16 %v502, %v502
            %v519 = vpack.c.b16 %v503, %v503
            %v520 = vpack.c.b16 %v504, %v504
            %v521 = vpack.c.b16 %v505, %v505
            %v522 = vpack.c.b16 %v506, %v506
            %v523 = vpack.c.b16 %v507, %v507
            %v524 = vpack.c.b16 %v508, %v508
            %v525 = vpack.c.b16 %v509, %v509
            %v526 = vpack.c.b16 %v510, %v510
            %v527 = vpack.c.b16 %v511, %v511
            %v528 = vpack.c.b16 %v512, %v512
            %v529 = vpack.c.b16 %v513, %v513
            %v530 = vpack.c.b16 %v514, %v514
            %v531 = vpack.c.b16 %v515, %v515
            %v532 = vpack.c.b16 %v516, %v516
            %s549 = smul.addr %s184, 4
            %s550 = scalar_lea.vmem [#allocation2], %s549
            %551 = vst [vmem:[%s550] sm:$0xf] %v517
            %552 = vst [vmem:[%s550 + $0x4] sm:$0xf] %v518
            %553 = vst [vmem:[%s550 + $0x8] sm:$0xf] %v519
            %554 = vst [vmem:[%s550 + $0xc] sm:$0xf] %v520
            %555 = vst [vmem:[%s550 + $0x10] sm:$0xf] %v521
            %556 = vst [vmem:[%s550 + $0x14] sm:$0xf] %v522
            %557 = vst [vmem:[%s550 + $0x18] sm:$0xf] %v523
            %558 = vst [vmem:[%s550 + $0x1c] sm:$0xf] %v524
            %559 = vst [vmem:[%s550 + $0x20] sm:$0xf] %v525
            %560 = vst [vmem:[%s550 + $0x24] sm:$0xf] %v526
            %561 = vst [vmem:[%s550 + $0x28] sm:$0xf] %v527
            %562 = vst [vmem:[%s550 + $0x2c] sm:$0xf] %v528
            %563 = vst [vmem:[%s550 + $0x30] sm:$0xf] %v529
            %564 = vst [vmem:[%s550 + $0x34] sm:$0xf] %v530
            %565 = vst [vmem:[%s550 + $0x38] sm:$0xf] %v531
            %566 = vst [vmem:[%s550 + $0x3c] sm:$0xf] %v532
            %s567 = scalar_lea.vmem [#allocation9], %s162
            %568 = vst [vmem:[%s567] sm:$0xff] %v429
            %569 = vst [vmem:[%s567 + $0x8] sm:$0xff] %v430
            %570 = vst [vmem:[%s567 + $0x10] sm:$0xff] %v431
            %571 = vst [vmem:[%s567 + $0x18] sm:$0xff] %v432
            %572 = vst [vmem:[%s567 + $0x20] sm:$0xff] %v433
            %573 = vst [vmem:[%s567 + $0x28] sm:$0xff] %v434
            %574 = vst [vmem:[%s567 + $0x30] sm:$0xff] %v435
            %575 = vst [vmem:[%s567 + $0x38] sm:$0xff] %v436
            %576 = vst [vmem:[%s567 + $0x40] sm:$0xff] %v437
            %577 = vst [vmem:[%s567 + $0x48] sm:$0xff] %v438
            %578 = vst [vmem:[%s567 + $0x50] sm:$0xff] %v439
            %579 = vst [vmem:[%s567 + $0x58] sm:$0xff] %v440
            %580 = vst [vmem:[%s567 + $0x60] sm:$0xff] %v441
            %581 = vst [vmem:[%s567 + $0x68] sm:$0xff] %v442
            %582 = vst [vmem:[%s567 + $0x70] sm:$0xff] %v443
            %583 = vst [vmem:[%s567 + $0x78] sm:$0xff] %v444
          $region48: #{tpu_custom_call.1} parent=39 // pred_fallthru
            _
        $region40: #{tpu_custom_call.1} parent=27 // pred_fallthru
          _
        %s584 = sand.u32 %s20, 1
        %p585 = scmp.eq.s32.totalorder %s584, 1
        // Predicated region
        $region49: #{tpu_custom_call.1} parent=27 // pred_check
          %p586 = pneg %p585
        $region50: #{tpu_custom_call.1} parent=27 // pred_check_branch
          %588 = sbr.rel (%p586) target = $region52
        $region51: #{tpu_custom_call.1} parent=27 // pred_region
          %v589 = vld [vmem:[#allocation2] sm:$0xf]
          %v590 = vld [vmem:[#allocation2 + $0x4] sm:$0xf]
          %v591 = vld [vmem:[#allocation2 + $0x8] sm:$0xf]
          %v592 = vld [vmem:[#allocation2 + $0xc] sm:$0xf]
          %v593 = vld [vmem:[#allocation2 + $0x10] sm:$0xf]
          %v594 = vld [vmem:[#allocation2 + $0x14] sm:$0xf]
          %v595 = vld [vmem:[#allocation2 + $0x18] sm:$0xf]
          %v596 = vld [vmem:[#allocation2 + $0x1c] sm:$0xf]
          %v597 = vld [vmem:[#allocation2 + $0x20] sm:$0xf]
          %v598 = vld [vmem:[#allocation2 + $0x24] sm:$0xf]
          %v599 = vld [vmem:[#allocation2 + $0x28] sm:$0xf]
          %v600 = vld [vmem:[#allocation2 + $0x2c] sm:$0xf]
          %v601 = vld [vmem:[#allocation2 + $0x30] sm:$0xf]
          %v602 = vld [vmem:[#allocation2 + $0x34] sm:$0xf]
          %v603 = vld [vmem:[#allocation2 + $0x38] sm:$0xf]
          %v604 = vld [vmem:[#allocation2 + $0x3c] sm:$0xf]
          %s605 = scalar_lea.vmem [#allocation9], %s162
          %v606 = vld [vmem:[%s605] sm:$0xff]
          %v607 = vld [vmem:[%s605 + $0x8] sm:$0xff]
          %v608 = vld [vmem:[%s605 + $0x10] sm:$0xff]
          %v609 = vld [vmem:[%s605 + $0x18] sm:$0xff]
          %v610 = vld [vmem:[%s605 + $0x20] sm:$0xff]
          %v611 = vld [vmem:[%s605 + $0x28] sm:$0xff]
          %v612 = vld [vmem:[%s605 + $0x30] sm:$0xff]
          %v613 = vld [vmem:[%s605 + $0x38] sm:$0xff]
          %v614 = vld [vmem:[%s605 + $0x40] sm:$0xff]
          %v615 = vld [vmem:[%s605 + $0x48] sm:$0xff]
          %v616 = vld [vmem:[%s605 + $0x50] sm:$0xff]
          %v617 = vld [vmem:[%s605 + $0x58] sm:$0xff]
          %v618 = vld [vmem:[%s605 + $0x60] sm:$0xff]
          %v619 = vld [vmem:[%s605 + $0x68] sm:$0xff]
          %v620 = vld [vmem:[%s605 + $0x70] sm:$0xff]
          %v621 = vld [vmem:[%s605 + $0x78] sm:$0xff]
          %v622 = vld [vmem:[#allocation4] sm:$0xf]
          %v623 = vld [vmem:[#allocation4 + $0x4] sm:$0xf]
          %v624 = vld [vmem:[#allocation4 + $0x8] sm:$0xf]
          %v625 = vld [vmem:[#allocation4 + $0xc] sm:$0xf]
          %v626 = vld [vmem:[#allocation4 + $0x10] sm:$0xf]
          %v627 = vld [vmem:[#allocation4 + $0x14] sm:$0xf]
          %v628 = vld [vmem:[#allocation4 + $0x18] sm:$0xf]
          %v629 = vld [vmem:[#allocation4 + $0x1c] sm:$0xf]
          %v630 = vld [vmem:[#allocation4 + $0x20] sm:$0xf]
          %v631 = vld [vmem:[#allocation4 + $0x24] sm:$0xf]
          %v632 = vld [vmem:[#allocation4 + $0x28] sm:$0xf]
          %v633 = vld [vmem:[#allocation4 + $0x2c] sm:$0xf]
          %v634 = vld [vmem:[#allocation4 + $0x30] sm:$0xf]
          %v635 = vld [vmem:[#allocation4 + $0x34] sm:$0xf]
          %v636 = vld [vmem:[#allocation4 + $0x38] sm:$0xf]
          %v637 = vld [vmem:[#allocation4 + $0x3c] sm:$0xf]
          %v654 = vunpack.c.l.b16 %v622
          %v655 = vunpack.c.l.b16 %v623
          %v656 = vunpack.c.l.b16 %v624
          %v657 = vunpack.c.l.b16 %v625
          %v658 = vunpack.c.l.b16 %v626
          %v659 = vunpack.c.l.b16 %v627
          %v660 = vunpack.c.l.b16 %v628
          %v661 = vunpack.c.l.b16 %v629
          %v662 = vunpack.c.l.b16 %v630
          %v663 = vunpack.c.l.b16 %v631
          %v664 = vunpack.c.l.b16 %v632
          %v665 = vunpack.c.l.b16 %v633
          %v666 = vunpack.c.l.b16 %v634
          %v667 = vunpack.c.l.b16 %v635
          %v668 = vunpack.c.l.b16 %v636
          %v669 = vunpack.c.l.b16 %v637
          %v670 = vpack.c.b16 %v655, %v654
          %v671 = vpack.c.b16 %v657, %v656
          %v672 = vpack.c.b16 %v659, %v658
          %v673 = vpack.c.b16 %v661, %v660
          %v674 = vpack.c.b16 %v663, %v662
          %v675 = vpack.c.b16 %v665, %v664
          %v676 = vpack.c.b16 %v667, %v666
          %v677 = vpack.c.b16 %v669, %v668
          %v702 = vunpack.c.l.b16 %v589
          %v703 = vunpack.c.l.b16 %v590
          %v704 = vunpack.c.l.b16 %v591
          %v705 = vunpack.c.l.b16 %v592
          %v706 = vunpack.c.l.b16 %v593
          %v707 = vunpack.c.l.b16 %v594
          %v708 = vunpack.c.l.b16 %v595
          %v709 = vunpack.c.l.b16 %v596
          %v710 = vunpack.c.l.b16 %v597
          %v711 = vunpack.c.l.b16 %v598
          %v712 = vunpack.c.l.b16 %v599
          %v713 = vunpack.c.l.b16 %v600
          %v714 = vunpack.c.l.b16 %v601
          %v715 = vunpack.c.l.b16 %v602
          %v716 = vunpack.c.l.b16 %v603
          %v717 = vunpack.c.l.b16 %v604
          %v718 = vpack.c.b16 %v703, %v702
          %v719 = vpack.c.b16 %v705, %v704
          %v720 = vpack.c.b16 %v707, %v706
          %v721 = vpack.c.b16 %v709, %v708
          %v722 = vpack.c.b16 %v711, %v710
          %v723 = vpack.c.b16 %v713, %v712
          %v724 = vpack.c.b16 %v715, %v714
          %v725 = vpack.c.b16 %v717, %v716
          %734 = vmatprep.subr.bf16.mxu0 0
          %735 = vmatpush1.bf16.msra.mxu0 %v725
          %736 = vmatprep.subr.bf16.mxu0 0
          %737 = vmatpush1.bf16.msra.mxu0 %v724
          %738 = vmatprep.subr.bf16.mxu0 0
          %739 = vmatpush1.bf16.msra.mxu0 %v723
          %740 = vmatprep.subr.bf16.mxu0 0
          %741 = vmatpush1.bf16.msra.mxu0 %v722
          %742 = vmatprep.subr.bf16.mxu0 0
          %743 = vmatpush1.bf16.msra.mxu0 %v721
          %744 = vmatprep.subr.bf16.mxu0 0
          %745 = vmatpush1.bf16.msra.mxu0 %v720
          %746 = vmatprep.subr.bf16.mxu0 0
          %747 = vmatpush1.bf16.msra.mxu0 %v719
          %748 = vmatprep.subr.bf16.mxu0 0
          %749 = vmatpush1.bf16.msra.mxu0 %v718
          %750 = vmatprep.subr.bf16.mxu0 0
          %751 = vmatpush2.bf16.msra.mxu0 0
          %752 = vmatprep.subr.bf16.mxu0 0
          %753 = vmatpush2.bf16.msra.mxu0 0
          %754 = vmatprep.subr.bf16.mxu0 0
          %755 = vmatpush2.bf16.msra.mxu0 0
          %756 = vmatprep.subr.bf16.mxu0 0
          %757 = vmatpush2.bf16.msra.mxu0 0
          %758 = vmatprep.subr.bf16.mxu0 0
          %759 = vmatpush2.bf16.msra.mxu0 0
          %760 = vmatprep.subr.bf16.mxu0 0
          %761 = vmatpush2.bf16.msra.mxu0 0
          %762 = vmatprep.subr.bf16.mxu0 0
          %763 = vmatpush2.bf16.msra.mxu0 0
          %764 = vmatprep.subr.bf16.mxu0 0
          %765 = vmatpush2.bf16.msra.mxu0 0
          %766 = vmatprep.mubr.bf16.mxu0 0
          %767 = vmatmul.mubr.bf16.gmra.mxu0 %v670
          %v768 = vpop.f32.mrf.mxu0
          %v769 = vadd.f32 0.0, %v768
          %v770 = vpop.f32.mrf.mxu0
          %v771 = vpop.f32.mrf.mxu0
          %v772 = vadd.f32 0.0, %v771
          %v773 = vpop.f32.mrf.mxu0
          %774 = vmatprep.mubr.bf16.mxu0 0
          %775 = vmatmul.mubr.bf16.gmra.mxu0 %v671
          %v776 = vpop.f32.mrf.mxu0
          %v777 = vadd.f32 0.0, %v776
          %v778 = vpop.f32.mrf.mxu0
          %v779 = vpop.f32.mrf.mxu0
          %v780 = vadd.f32 0.0, %v779
          %v781 = vpop.f32.mrf.mxu0
          %782 = vmatprep.mubr.bf16.mxu0 0
          %783 = vmatmul.mubr.bf16.gmra.mxu0 %v672
          %v784 = vpop.f32.mrf.mxu0
          %v785 = vadd.f32 0.0, %v784
          %v786 = vpop.f32.mrf.mxu0
          %v787 = vpop.f32.mrf.mxu0
          %v788 = vadd.f32 0.0, %v787
          %v789 = vpop.f32.mrf.mxu0
          %790 = vmatprep.mubr.bf16.mxu0 0
          %791 = vmatmul.mubr.bf16.gmra.mxu0 %v673
          %v792 = vpop.f32.mrf.mxu0
          %v793 = vadd.f32 0.0, %v792
          %v794 = vpop.f32.mrf.mxu0
          %v795 = vpop.f32.mrf.mxu0
          %v796 = vadd.f32 0.0, %v795
          %v797 = vpop.f32.mrf.mxu0
          %798 = vmatprep.mubr.bf16.mxu0 0
          %799 = vmatmul.mubr.bf16.gmra.mxu0 %v674
          %v800 = vpop.f32.mrf.mxu0
          %v801 = vadd.f32 0.0, %v800
          %v802 = vpop.f32.mrf.mxu0
          %v803 = vpop.f32.mrf.mxu0
          %v804 = vadd.f32 0.0, %v803
          %v805 = vpop.f32.mrf.mxu0
          %806 = vmatprep.mubr.bf16.mxu0 0
          %807 = vmatmul.mubr.bf16.gmra.mxu0 %v675
          %v808 = vpop.f32.mrf.mxu0
          %v809 = vadd.f32 0.0, %v808
          %v810 = vpop.f32.mrf.mxu0
          %v811 = vpop.f32.mrf.mxu0
          %v812 = vadd.f32 0.0, %v811
          %v813 = vpop.f32.mrf.mxu0
          %814 = vmatprep.mubr.bf16.mxu0 0
          %815 = vmatmul.mubr.bf16.gmra.mxu0 %v676
          %v816 = vpop.f32.mrf.mxu0
          %v817 = vadd.f32 0.0, %v816
          %v818 = vpop.f32.mrf.mxu0
          %v819 = vpop.f32.mrf.mxu0
          %v820 = vadd.f32 0.0, %v819
          %v821 = vpop.f32.mrf.mxu0
          %822 = vmatprep.mubr.bf16.mxu0 0
          %823 = vmatmul.mubr.bf16.gmra.mxu0 %v677
          %v824 = vpop.f32.mrf.mxu0
          %v825 = vadd.f32 0.0, %v824
          %v826 = vpop.f32.mrf.mxu0
          %v827 = vpop.f32.mrf.mxu0
          %v828 = vadd.f32 0.0, %v827
          %v829 = vpop.f32.mrf.mxu0
          %830 = vdwg.mxu0
          %v831 = vadd.f32 %v606, %v769
          %v832 = vadd.f32 %v607, %v772
          %v833 = vadd.f32 %v608, %v777
          %v834 = vadd.f32 %v609, %v780
          %v835 = vadd.f32 %v610, %v785
          %v836 = vadd.f32 %v611, %v788
          %v837 = vadd.f32 %v612, %v793
          %v838 = vadd.f32 %v613, %v796
          %v839 = vadd.f32 %v614, %v801
          %v840 = vadd.f32 %v615, %v804
          %v841 = vadd.f32 %v616, %v809
          %v842 = vadd.f32 %v617, %v812
          %v843 = vadd.f32 %v618, %v817
          %v844 = vadd.f32 %v619, %v820
          %v845 = vadd.f32 %v620, %v825
          %v846 = vadd.f32 %v621, %v828
          // Predicated region
          $region53: #{tpu_custom_call.1} parent=51 // pred_check
            %p847 = pneg %p163
          $region54: #{tpu_custom_call.1} parent=51 // pred_check_branch
            %849 = sbr.rel (%p847) target = $region56
          $region55: #{tpu_custom_call.1} parent=51 // pred_region
            %v850 = vmul.f32 %v831, 0.25
            %v851 = vmul.f32 %v832, 0.25
            %v852 = vmul.f32 %v833, 0.25
            %v853 = vmul.f32 %v834, 0.25
            %v854 = vmul.f32 %v835, 0.25
            %v855 = vmul.f32 %v836, 0.25
            %v856 = vmul.f32 %v837, 0.25
            %v857 = vmul.f32 %v838, 0.25
            %v858 = vmul.f32 %v839, 0.25
            %v859 = vmul.f32 %v840, 0.25
            %v860 = vmul.f32 %v841, 0.25
            %v861 = vmul.f32 %v842, 0.25
            %v862 = vmul.f32 %v843, 0.25
            %v863 = vmul.f32 %v844, 0.25
            %v864 = vmul.f32 %v845, 0.25
            %v865 = vmul.f32 %v846, 0.25
            %866 = vst [vmem:[%s605] sm:$0xff] %v850
            %867 = vst [vmem:[%s605 + $0x8] sm:$0xff] %v851
            %868 = vst [vmem:[%s605 + $0x10] sm:$0xff] %v852
            %869 = vst [vmem:[%s605 + $0x18] sm:$0xff] %v853
            %870 = vst [vmem:[%s605 + $0x20] sm:$0xff] %v854
            %871 = vst [vmem:[%s605 + $0x28] sm:$0xff] %v855
            %872 = vst [vmem:[%s605 + $0x30] sm:$0xff] %v856
            %873 = vst [vmem:[%s605 + $0x38] sm:$0xff] %v857
            %874 = vst [vmem:[%s605 + $0x40] sm:$0xff] %v858
            %875 = vst [vmem:[%s605 + $0x48] sm:$0xff] %v859
            %876 = vst [vmem:[%s605 + $0x50] sm:$0xff] %v860
            %877 = vst [vmem:[%s605 + $0x58] sm:$0xff] %v861
            %878 = vst [vmem:[%s605 + $0x60] sm:$0xff] %v862
            %879 = vst [vmem:[%s605 + $0x68] sm:$0xff] %v863
            %880 = vst [vmem:[%s605 + $0x70] sm:$0xff] %v864
            %881 = vst [vmem:[%s605 + $0x78] sm:$0xff] %v865
          $region56: #{tpu_custom_call.1} parent=51 // pred_fallthru
            _
          %p882 = scmp.ne.s32.totalorder %s20, 2
          // Predicated region
          $region57: #{tpu_custom_call.1} parent=51 // pred_check
            %p883 = pneg %p882
          $region58: #{tpu_custom_call.1} parent=51 // pred_check_branch
            %885 = sbr.rel (%p883) target = $region60
          $region59: #{tpu_custom_call.1} parent=51 // pred_region
            %v886 = vpack.c.bf16 %v772, %v769
            %v887 = vpack.c.bf16 %v780, %v777
            %v888 = vpack.c.bf16 %v788, %v785
            %v889 = vpack.c.bf16 %v796, %v793
            %v890 = vpack.c.bf16 %v804, %v801
            %v891 = vpack.c.bf16 %v812, %v809
            %v892 = vpack.c.bf16 %v820, %v817
            %v893 = vpack.c.bf16 %v828, %v825
            %v902 = vunpack.c.l.b16 %v886
            %v903 = vunpack.c.h.b16 %v886
            %v904 = vunpack.c.l.b16 %v887
            %v905 = vunpack.c.h.b16 %v887
            %v906 = vunpack.c.l.b16 %v888
            %v907 = vunpack.c.h.b16 %v888
            %v908 = vunpack.c.l.b16 %v889
            %v909 = vunpack.c.h.b16 %v889
            %v910 = vunpack.c.l.b16 %v890
            %v911 = vunpack.c.h.b16 %v890
            %v912 = vunpack.c.l.b16 %v891
            %v913 = vunpack.c.h.b16 %v891
            %v914 = vunpack.c.l.b16 %v892
            %v915 = vunpack.c.h.b16 %v892
            %v916 = vunpack.c.l.b16 %v893
            %v917 = vunpack.c.h.b16 %v893
            %v918 = vpack.c.b16 %v902, %v902
            %v919 = vpack.c.b16 %v903, %v903
            %v920 = vpack.c.b16 %v904, %v904
            %v921 = vpack.c.b16 %v905, %v905
            %v922 = vpack.c.b16 %v906, %v906
            %v923 = vpack.c.b16 %v907, %v907
            %v924 = vpack.c.b16 %v908, %v908
            %v925 = vpack.c.b16 %v909, %v909
            %v926 = vpack.c.b16 %v910, %v910
            %v927 = vpack.c.b16 %v911, %v911
            %v928 = vpack.c.b16 %v912, %v912
            %v929 = vpack.c.b16 %v913, %v913
            %v930 = vpack.c.b16 %v914, %v914
            %v931 = vpack.c.b16 %v915, %v915
            %v932 = vpack.c.b16 %v916, %v916
            %v933 = vpack.c.b16 %v917, %v917
            %s950 = sshra.s32 %s162, 3
            %s951 = sand.u32 %s162, 7
            %s952 = smul.addr %s950, 4
            %s953 = scalar_lea.vmem [#allocation3], %s952
            %954 = vst [vmem:[%s953] sm:$0xf] %v918
            %955 = vst [vmem:[%s953 + $0x4] sm:$0xf] %v919
            %956 = vst [vmem:[%s953 + $0x8] sm:$0xf] %v920
            %957 = vst [vmem:[%s953 + $0xc] sm:$0xf] %v921
            %958 = vst [vmem:[%s953 + $0x10] sm:$0xf] %v922
            %959 = vst [vmem:[%s953 + $0x14] sm:$0xf] %v923
            %960 = vst [vmem:[%s953 + $0x18] sm:$0xf] %v924
            %961 = vst [vmem:[%s953 + $0x1c] sm:$0xf] %v925
            %962 = vst [vmem:[%s953 + $0x20] sm:$0xf] %v926
            %963 = vst [vmem:[%s953 + $0x24] sm:$0xf] %v927
            %964 = vst [vmem:[%s953 + $0x28] sm:$0xf] %v928
            %965 = vst [vmem:[%s953 + $0x2c] sm:$0xf] %v929
            %966 = vst [vmem:[%s953 + $0x30] sm:$0xf] %v930
            %967 = vst [vmem:[%s953 + $0x34] sm:$0xf] %v931
            %968 = vst [vmem:[%s953 + $0x38] sm:$0xf] %v932
            %969 = vst [vmem:[%s953 + $0x3c] sm:$0xf] %v933
            %970 = vst [vmem:[%s605] sm:$0xff] %v831
            %971 = vst [vmem:[%s605 + $0x8] sm:$0xff] %v832
            %972 = vst [vmem:[%s605 + $0x10] sm:$0xff] %v833
            %973 = vst [vmem:[%s605 + $0x18] sm:$0xff] %v834
            %974 = vst [vmem:[%s605 + $0x20] sm:$0xff] %v835
            %975 = vst [vmem:[%s605 + $0x28] sm:$0xff] %v836
            %976 = vst [vmem:[%s605 + $0x30] sm:$0xff] %v837
            %977 = vst [vmem:[%s605 + $0x38] sm:$0xff] %v838
            %978 = vst [vmem:[%s605 + $0x40] sm:$0xff] %v839
            %979 = vst [vmem:[%s605 + $0x48] sm:$0xff] %v840
            %980 = vst [vmem:[%s605 + $0x50] sm:$0xff] %v841
            %981 = vst [vmem:[%s605 + $0x58] sm:$0xff] %v842
            %982 = vst [vmem:[%s605 + $0x60] sm:$0xff] %v843
            %983 = vst [vmem:[%s605 + $0x68] sm:$0xff] %v844
            %984 = vst [vmem:[%s605 + $0x70] sm:$0xff] %v845
            %985 = vst [vmem:[%s605 + $0x78] sm:$0xff] %v846
          $region60: #{tpu_custom_call.1} parent=51 // pred_fallthru
            _
        $region52: #{tpu_custom_call.1} parent=27 // pred_fallthru
          _
        %p986 = scmp.gt.s32.totalorder %s20, 0
        %p987 = scmp.ne.s32.totalorder %s584, 1
        %p988 = pnand %p986, %p987
        %p989 = pneg %p988
        // Predicated region
        $region61: #{tpu_custom_call.1} parent=27 // pred_check
          _
        $region62: #{tpu_custom_call.1} parent=27 // pred_check_branch
          %991 = sbr.rel (%p988) target = $region64
        $region63: #{tpu_custom_call.1} parent=27 // pred_region
          %v992 = vld [vmem:[#allocation3] sm:$0xf]
          %v993 = vld [vmem:[#allocation3 + $0x4] sm:$0xf]
          %v994 = vld [vmem:[#allocation3 + $0x8] sm:$0xf]
          %v995 = vld [vmem:[#allocation3 + $0xc] sm:$0xf]
          %v996 = vld [vmem:[#allocation3 + $0x10] sm:$0xf]
          %v997 = vld [vmem:[#allocation3 + $0x14] sm:$0xf]
          %v998 = vld [vmem:[#allocation3 + $0x18] sm:$0xf]
          %v999 = vld [vmem:[#allocation3 + $0x1c] sm:$0xf]
          %v1000 = vld [vmem:[#allocation3 + $0x20] sm:$0xf]
          %v1001 = vld [vmem:[#allocation3 + $0x24] sm:$0xf]
          %v1002 = vld [vmem:[#allocation3 + $0x28] sm:$0xf]
          %v1003 = vld [vmem:[#allocation3 + $0x2c] sm:$0xf]
          %v1004 = vld [vmem:[#allocation3 + $0x30] sm:$0xf]
          %v1005 = vld [vmem:[#allocation3 + $0x34] sm:$0xf]
          %v1006 = vld [vmem:[#allocation3 + $0x38] sm:$0xf]
          %v1007 = vld [vmem:[#allocation3 + $0x3c] sm:$0xf]
          %s1008 = scalar_lea.vmem [#allocation9], %s162
          %v1009 = vld [vmem:[%s1008] sm:$0xff]
          %v1010 = vld [vmem:[%s1008 + $0x8] sm:$0xff]
          %v1011 = vld [vmem:[%s1008 + $0x10] sm:$0xff]
          %v1012 = vld [vmem:[%s1008 + $0x18] sm:$0xff]
          %v1013 = vld [vmem:[%s1008 + $0x20] sm:$0xff]
          %v1014 = vld [vmem:[%s1008 + $0x28] sm:$0xff]
          %v1015 = vld [vmem:[%s1008 + $0x30] sm:$0xff]
          %v1016 = vld [vmem:[%s1008 + $0x38] sm:$0xff]
          %v1017 = vld [vmem:[%s1008 + $0x40] sm:$0xff]
          %v1018 = vld [vmem:[%s1008 + $0x48] sm:$0xff]
          %v1019 = vld [vmem:[%s1008 + $0x50] sm:$0xff]
          %v1020 = vld [vmem:[%s1008 + $0x58] sm:$0xff]
          %v1021 = vld [vmem:[%s1008 + $0x60] sm:$0xff]
          %v1022 = vld [vmem:[%s1008 + $0x68] sm:$0xff]
          %v1023 = vld [vmem:[%s1008 + $0x70] sm:$0xff]
          %v1024 = vld [vmem:[%s1008 + $0x78] sm:$0xff]
          %v1025 = vld [vmem:[#allocation4] sm:$0xf]
          %v1026 = vld [vmem:[#allocation4 + $0x4] sm:$0xf]
          %v1027 = vld [vmem:[#allocation4 + $0x8] sm:$0xf]
          %v1028 = vld [vmem:[#allocation4 + $0xc] sm:$0xf]
          %v1029 = vld [vmem:[#allocation4 + $0x10] sm:$0xf]
          %v1030 = vld [vmem:[#allocation4 + $0x14] sm:$0xf]
          %v1031 = vld [vmem:[#allocation4 + $0x18] sm:$0xf]
          %v1032 = vld [vmem:[#allocation4 + $0x1c] sm:$0xf]
          %v1033 = vld [vmem:[#allocation4 + $0x20] sm:$0xf]
          %v1034 = vld [vmem:[#allocation4 + $0x24] sm:$0xf]
          %v1035 = vld [vmem:[#allocation4 + $0x28] sm:$0xf]
          %v1036 = vld [vmem:[#allocation4 + $0x2c] sm:$0xf]
          %v1037 = vld [vmem:[#allocation4 + $0x30] sm:$0xf]
          %v1038 = vld [vmem:[#allocation4 + $0x34] sm:$0xf]
          %v1039 = vld [vmem:[#allocation4 + $0x38] sm:$0xf]
          %v1040 = vld [vmem:[#allocation4 + $0x3c] sm:$0xf]
          %v1057 = vunpack.c.l.b16 %v1025
          %v1058 = vunpack.c.l.b16 %v1026
          %v1059 = vunpack.c.l.b16 %v1027
          %v1060 = vunpack.c.l.b16 %v1028
          %v1061 = vunpack.c.l.b16 %v1029
          %v1062 = vunpack.c.l.b16 %v1030
          %v1063 = vunpack.c.l.b16 %v1031
          %v1064 = vunpack.c.l.b16 %v1032
          %v1065 = vunpack.c.l.b16 %v1033
          %v1066 = vunpack.c.l.b16 %v1034
          %v1067 = vunpack.c.l.b16 %v1035
          %v1068 = vunpack.c.l.b16 %v1036
          %v1069 = vunpack.c.l.b16 %v1037
          %v1070 = vunpack.c.l.b16 %v1038
          %v1071 = vunpack.c.l.b16 %v1039
          %v1072 = vunpack.c.l.b16 %v1040
          %v1073 = vpack.c.b16 %v1058, %v1057
          %v1074 = vpack.c.b16 %v1060, %v1059
          %v1075 = vpack.c.b16 %v1062, %v1061
          %v1076 = vpack.c.b16 %v1064, %v1063
          %v1077 = vpack.c.b16 %v1066, %v1065
          %v1078 = vpack.c.b16 %v1068, %v1067
          %v1079 = vpack.c.b16 %v1070, %v1069
          %v1080 = vpack.c.b16 %v1072, %v1071
          %v1105 = vunpack.c.l.b16 %v992
          %v1106 = vunpack.c.l.b16 %v993
          %v1107 = vunpack.c.l.b16 %v994
          %v1108 = vunpack.c.l.b16 %v995
          %v1109 = vunpack.c.l.b16 %v996
          %v1110 = vunpack.c.l.b16 %v997
          %v1111 = vunpack.c.l.b16 %v998
          %v1112 = vunpack.c.l.b16 %v999
          %v1113 = vunpack.c.l.b16 %v1000
          %v1114 = vunpack.c.l.b16 %v1001
          %v1115 = vunpack.c.l.b16 %v1002
          %v1116 = vunpack.c.l.b16 %v1003
          %v1117 = vunpack.c.l.b16 %v1004
          %v1118 = vunpack.c.l.b16 %v1005
          %v1119 = vunpack.c.l.b16 %v1006
          %v1120 = vunpack.c.l.b16 %v1007
          %v1121 = vpack.c.b16 %v1106, %v1105
          %v1122 = vpack.c.b16 %v1108, %v1107
          %v1123 = vpack.c.b16 %v1110, %v1109
          %v1124 = vpack.c.b16 %v1112, %v1111
          %v1125 = vpack.c.b16 %v1114, %v1113
          %v1126 = vpack.c.b16 %v1116, %v1115
          %v1127 = vpack.c.b16 %v1118, %v1117
          %v1128 = vpack.c.b16 %v1120, %v1119
          %1137 = vmatprep.subr.bf16.mxu0 0
          %1138 = vmatpush1.bf16.msra.mxu0 %v1128
          %1139 = vmatprep.subr.bf16.mxu0 0
          %1140 = vmatpush1.bf16.msra.mxu0 %v1127
          %1141 = vmatprep.subr.bf16.mxu0 0
          %1142 = vmatpush1.bf16.msra.mxu0 %v1126
          %1143 = vmatprep.subr.bf16.mxu0 0
          %1144 = vmatpush1.bf16.msra.mxu0 %v1125
          %1145 = vmatprep.subr.bf16.mxu0 0
          %1146 = vmatpush1.bf16.msra.mxu0 %v1124
          %1147 = vmatprep.subr.bf16.mxu0 0
          %1148 = vmatpush1.bf16.msra.mxu0 %v1123
          %1149 = vmatprep.subr.bf16.mxu0 0
          %1150 = vmatpush1.bf16.msra.mxu0 %v1122
          %1151 = vmatprep.subr.bf16.mxu0 0
          %1152 = vmatpush1.bf16.msra.mxu0 %v1121
          %1153 = vmatprep.subr.bf16.mxu0 0
          %1154 = vmatpush2.bf16.msra.mxu0 0
          %1155 = vmatprep.subr.bf16.mxu0 0
          %1156 = vmatpush2.bf16.msra.mxu0 0
          %1157 = vmatprep.subr.bf16.mxu0 0
          %1158 = vmatpush2.bf16.msra.mxu0 0
          %1159 = vmatprep.subr.bf16.mxu0 0
          %1160 = vmatpush2.bf16.msra.mxu0 0
          %1161 = vmatprep.subr.bf16.mxu0 0
          %1162 = vmatpush2.bf16.msra.mxu0 0
          %1163 = vmatprep.subr.bf16.mxu0 0
          %1164 = vmatpush2.bf16.msra.mxu0 0
          %1165 = vmatprep.subr.bf16.mxu0 0
          %1166 = vmatpush2.bf16.msra.mxu0 0
          %1167 = vmatprep.subr.bf16.mxu0 0
          %1168 = vmatpush2.bf16.msra.mxu0 0
          %1169 = vmatprep.mubr.bf16.mxu0 0
          %1170 = vmatmul.mubr.bf16.gmra.mxu0 %v1073
          %v1171 = vpop.f32.mrf.mxu0
          %v1172 = vadd.f32 0.0, %v1171
          %v1173 = vpop.f32.mrf.mxu0
          %v1174 = vpop.f32.mrf.mxu0
          %v1175 = vadd.f32 0.0, %v1174
          %v1176 = vpop.f32.mrf.mxu0
          %1177 = vmatprep.mubr.bf16.mxu0 0
          %1178 = vmatmul.mubr.bf16.gmra.mxu0 %v1074
          %v1179 = vpop.f32.mrf.mxu0
          %v1180 = vadd.f32 0.0, %v1179
          %v1181 = vpop.f32.mrf.mxu0
          %v1182 = vpop.f32.mrf.mxu0
          %v1183 = vadd.f32 0.0, %v1182
          %v1184 = vpop.f32.mrf.mxu0
          %1185 = vmatprep.mubr.bf16.mxu0 0
          %1186 = vmatmul.mubr.bf16.gmra.mxu0 %v1075
          %v1187 = vpop.f32.mrf.mxu0
          %v1188 = vadd.f32 0.0, %v1187
          %v1189 = vpop.f32.mrf.mxu0
          %v1190 = vpop.f32.mrf.mxu0
          %v1191 = vadd.f32 0.0, %v1190
          %v1192 = vpop.f32.mrf.mxu0
          %1193 = vmatprep.mubr.bf16.mxu0 0
          %1194 = vmatmul.mubr.bf16.gmra.mxu0 %v1076
          %v1195 = vpop.f32.mrf.mxu0
          %v1196 = vadd.f32 0.0, %v1195
          %v1197 = vpop.f32.mrf.mxu0
          %v1198 = vpop.f32.mrf.mxu0
          %v1199 = vadd.f32 0.0, %v1198
          %v1200 = vpop.f32.mrf.mxu0
          %1201 = vmatprep.mubr.bf16.mxu0 0
          %1202 = vmatmul.mubr.bf16.gmra.mxu0 %v1077
          %v1203 = vpop.f32.mrf.mxu0
          %v1204 = vadd.f32 0.0, %v1203
          %v1205 = vpop.f32.mrf.mxu0
          %v1206 = vpop.f32.mrf.mxu0
          %v1207 = vadd.f32 0.0, %v1206
          %v1208 = vpop.f32.mrf.mxu0
          %1209 = vmatprep.mubr.bf16.mxu0 0
          %1210 = vmatmul.mubr.bf16.gmra.mxu0 %v1078
          %v1211 = vpop.f32.mrf.mxu0
          %v1212 = vadd.f32 0.0, %v1211
          %v1213 = vpop.f32.mrf.mxu0
          %v1214 = vpop.f32.mrf.mxu0
          %v1215 = vadd.f32 0.0, %v1214
          %v1216 = vpop.f32.mrf.mxu0
          %1217 = vmatprep.mubr.bf16.mxu0 0
          %1218 = vmatmul.mubr.bf16.gmra.mxu0 %v1079
          %v1219 = vpop.f32.mrf.mxu0
          %v1220 = vadd.f32 0.0, %v1219
          %v1221 = vpop.f32.mrf.mxu0
          %v1222 = vpop.f32.mrf.mxu0
          %v1223 = vadd.f32 0.0, %v1222
          %v1224 = vpop.f32.mrf.mxu0
          %1225 = vmatprep.mubr.bf16.mxu0 0
          %1226 = vmatmul.mubr.bf16.gmra.mxu0 %v1080
          %v1227 = vpop.f32.mrf.mxu0
          %v1228 = vadd.f32 0.0, %v1227
          %v1229 = vpop.f32.mrf.mxu0
          %v1230 = vpop.f32.mrf.mxu0
          %v1231 = vadd.f32 0.0, %v1230
          %v1232 = vpop.f32.mrf.mxu0
          %1233 = vdwg.mxu0
          %v1234 = vadd.f32 %v1009, %v1172
          %v1235 = vadd.f32 %v1010, %v1175
          %v1236 = vadd.f32 %v1011, %v1180
          %v1237 = vadd.f32 %v1012, %v1183
          %v1238 = vadd.f32 %v1013, %v1188
          %v1239 = vadd.f32 %v1014, %v1191
          %v1240 = vadd.f32 %v1015, %v1196
          %v1241 = vadd.f32 %v1016, %v1199
          %v1242 = vadd.f32 %v1017, %v1204
          %v1243 = vadd.f32 %v1018, %v1207
          %v1244 = vadd.f32 %v1019, %v1212
          %v1245 = vadd.f32 %v1020, %v1215
          %v1246 = vadd.f32 %v1021, %v1220
          %v1247 = vadd.f32 %v1022, %v1223
          %v1248 = vadd.f32 %v1023, %v1228
          %v1249 = vadd.f32 %v1024, %v1231
          // Predicated region
          $region65: #{tpu_custom_call.1} parent=63 // pred_check
            %p1250 = pneg %p163
          $region66: #{tpu_custom_call.1} parent=63 // pred_check_branch
            %1252 = sbr.rel (%p1250) target = $region68
          $region67: #{tpu_custom_call.1} parent=63 // pred_region
            %v1253 = vmul.f32 %v1234, 0.25
            %v1254 = vmul.f32 %v1235, 0.25
            %v1255 = vmul.f32 %v1236, 0.25
            %v1256 = vmul.f32 %v1237, 0.25
            %v1257 = vmul.f32 %v1238, 0.25
            %v1258 = vmul.f32 %v1239, 0.25
            %v1259 = vmul.f32 %v1240, 0.25
            %v1260 = vmul.f32 %v1241, 0.25
            %v1261 = vmul.f32 %v1242, 0.25
            %v1262 = vmul.f32 %v1243, 0.25
            %v1263 = vmul.f32 %v1244, 0.25
            %v1264 = vmul.f32 %v1245, 0.25
            %v1265 = vmul.f32 %v1246, 0.25
            %v1266 = vmul.f32 %v1247, 0.25
            %v1267 = vmul.f32 %v1248, 0.25
            %v1268 = vmul.f32 %v1249, 0.25
            %1269 = vst [vmem:[%s1008] sm:$0xff] %v1253
            %1270 = vst [vmem:[%s1008 + $0x8] sm:$0xff] %v1254
            %1271 = vst [vmem:[%s1008 + $0x10] sm:$0xff] %v1255
            %1272 = vst [vmem:[%s1008 + $0x18] sm:$0xff] %v1256
            %1273 = vst [vmem:[%s1008 + $0x20] sm:$0xff] %v1257
            %1274 = vst [vmem:[%s1008 + $0x28] sm:$0xff] %v1258
            %1275 = vst [vmem:[%s1008 + $0x30] sm:$0xff] %v1259
            %1276 = vst [vmem:[%s1008 + $0x38] sm:$0xff] %v1260
            %1277 = vst [vmem:[%s1008 + $0x40] sm:$0xff] %v1261
            %1278 = vst [vmem:[%s1008 + $0x48] sm:$0xff] %v1262
            %1279 = vst [vmem:[%s1008 + $0x50] sm:$0xff] %v1263
            %1280 = vst [vmem:[%s1008 + $0x58] sm:$0xff] %v1264
            %1281 = vst [vmem:[%s1008 + $0x60] sm:$0xff] %v1265
            %1282 = vst [vmem:[%s1008 + $0x68] sm:$0xff] %v1266
            %1283 = vst [vmem:[%s1008 + $0x70] sm:$0xff] %v1267
            %1284 = vst [vmem:[%s1008 + $0x78] sm:$0xff] %v1268
          $region68: #{tpu_custom_call.1} parent=63 // pred_fallthru
            _
          %p1285 = scmp.ne.s32.totalorder %s20, 2
          // Predicated region
          $region69: #{tpu_custom_call.1} parent=63 // pred_check
            %p1286 = pneg %p1285
          $region70: #{tpu_custom_call.1} parent=63 // pred_check_branch
            %1288 = sbr.rel (%p1286) target = $region72
          $region71: #{tpu_custom_call.1} parent=63 // pred_region
            %v1289 = vpack.c.bf16 %v1175, %v1172
            %v1290 = vpack.c.bf16 %v1183, %v1180
            %v1291 = vpack.c.bf16 %v1191, %v1188
            %v1292 = vpack.c.bf16 %v1199, %v1196
            %v1293 = vpack.c.bf16 %v1207, %v1204
            %v1294 = vpack.c.bf16 %v1215, %v1212
            %v1295 = vpack.c.bf16 %v1223, %v1220
            %v1296 = vpack.c.bf16 %v1231, %v1228
            %v1305 = vunpack.c.l.b16 %v1289
            %v1306 = vunpack.c.h.b16 %v1289
            %v1307 = vunpack.c.l.b16 %v1290
            %v1308 = vunpack.c.h.b16 %v1290
            %v1309 = vunpack.c.l.b16 %v1291
            %v1310 = vunpack.c.h.b16 %v1291
            %v1311 = vunpack.c.l.b16 %v1292
            %v1312 = vunpack.c.h.b16 %v1292
            %v1313 = vunpack.c.l.b16 %v1293
            %v1314 = vunpack.c.h.b16 %v1293
            %v1315 = vunpack.c.l.b16 %v1294
            %v1316 = vunpack.c.h.b16 %v1294
            %v1317 = vunpack.c.l.b16 %v1295
            %v1318 = vunpack.c.h.b16 %v1295
            %v1319 = vunpack.c.l.b16 %v1296
            %v1320 = vunpack.c.h.b16 %v1296
            %v1321 = vpack.c.b16 %v1305, %v1305
            %v1322 = vpack.c.b16 %v1306, %v1306
            %v1323 = vpack.c.b16 %v1307, %v1307
            %v1324 = vpack.c.b16 %v1308, %v1308
            %v1325 = vpack.c.b16 %v1309, %v1309
            %v1326 = vpack.c.b16 %v1310, %v1310
            %v1327 = vpack.c.b16 %v1311, %v1311
            %v1328 = vpack.c.b16 %v1312, %v1312
            %v1329 = vpack.c.b16 %v1313, %v1313
            %v1330 = vpack.c.b16 %v1314, %v1314
            %v1331 = vpack.c.b16 %v1315, %v1315
            %v1332 = vpack.c.b16 %v1316, %v1316
            %v1333 = vpack.c.b16 %v1317, %v1317
            %v1334 = vpack.c.b16 %v1318, %v1318
            %v1335 = vpack.c.b16 %v1319, %v1319
            %v1336 = vpack.c.b16 %v1320, %v1320
            %s1353 = sshra.s32 %s162, 3
            %s1354 = sand.u32 %s162, 7
            %s1355 = smul.addr %s1353, 4
            %s1356 = scalar_lea.vmem [#allocation2], %s1355
            %1357 = vst [vmem:[%s1356] sm:$0xf] %v1321
            %1358 = vst [vmem:[%s1356 + $0x4] sm:$0xf] %v1322
            %1359 = vst [vmem:[%s1356 + $0x8] sm:$0xf] %v1323
            %1360 = vst [vmem:[%s1356 + $0xc] sm:$0xf] %v1324
            %1361 = vst [vmem:[%s1356 + $0x10] sm:$0xf] %v1325
            %1362 = vst [vmem:[%s1356 + $0x14] sm:$0xf] %v1326
            %1363 = vst [vmem:[%s1356 + $0x18] sm:$0xf] %v1327
            %1364 = vst [vmem:[%s1356 + $0x1c] sm:$0xf] %v1328
            %1365 = vst [vmem:[%s1356 + $0x20] sm:$0xf] %v1329
            %1366 = vst [vmem:[%s1356 + $0x24] sm:$0xf] %v1330
            %1367 = vst [vmem:[%s1356 + $0x28] sm:$0xf] %v1331
            %1368 = vst [vmem:[%s1356 + $0x2c] sm:$0xf] %v1332
            %1369 = vst [vmem:[%s1356 + $0x30] sm:$0xf] %v1333
            %1370 = vst [vmem:[%s1356 + $0x34] sm:$0xf] %v1334
            %1371 = vst [vmem:[%s1356 + $0x38] sm:$0xf] %v1335
            %1372 = vst [vmem:[%s1356 + $0x3c] sm:$0xf] %v1336
            %1373 = vst [vmem:[%s1008] sm:$0xff] %v1234
            %1374 = vst [vmem:[%s1008 + $0x8] sm:$0xff] %v1235
            %1375 = vst [vmem:[%s1008 + $0x10] sm:$0xff] %v1236
            %1376 = vst [vmem:[%s1008 + $0x18] sm:$0xff] %v1237
            %1377 = vst [vmem:[%s1008 + $0x20] sm:$0xff] %v1238
            %1378 = vst [vmem:[%s1008 + $0x28] sm:$0xff] %v1239
            %1379 = vst [vmem:[%s1008 + $0x30] sm:$0xff] %v1240
            %1380 = vst [vmem:[%s1008 + $0x38] sm:$0xff] %v1241
            %1381 = vst [vmem:[%s1008 + $0x40] sm:$0xff] %v1242
            %1382 = vst [vmem:[%s1008 + $0x48] sm:$0xff] %v1243
            %1383 = vst [vmem:[%s1008 + $0x50] sm:$0xff] %v1244
            %1384 = vst [vmem:[%s1008 + $0x58] sm:$0xff] %v1245
            %1385 = vst [vmem:[%s1008 + $0x60] sm:$0xff] %v1246
            %1386 = vst [vmem:[%s1008 + $0x68] sm:$0xff] %v1247
            %1387 = vst [vmem:[%s1008 + $0x70] sm:$0xff] %v1248
            %1388 = vst [vmem:[%s1008 + $0x78] sm:$0xff] %v1249
          $region72: #{tpu_custom_call.1} parent=63 // pred_fallthru
            _
        $region64: #{tpu_custom_call.1} parent=27 // pred_fallthru
          _
        // Predicated region
        $region73: #{tpu_custom_call.1} parent=27 // pred_check
          %p1389 = pneg %p88
        $region74: #{tpu_custom_call.1} parent=27 // pred_check_branch
          %1391 = sbr.rel (%p1389) target = $region76
        $region75: #{tpu_custom_call.1} parent=27 // pred_region
          %s1393 = ssub.s32 2048, 2048
          %1394 = vsyncadd [#allocation6], %s1393
          %s1395 = sshll.u32 [#allocation9], 4
          %s1396 = int_to_ptr.vmem [resolvable:$true] %s1395
          %1401 = dma.vmem_to_hbm [thread:$0]  %s1396, 2048, %s2, [#allocation6], 128, 128, 8
        $region76: #{tpu_custom_call.1} parent=27 // pred_fallthru
          _
        // Predicated region
        $region77: #{tpu_custom_call.1} parent=27 // pred_check
          %p1402 = pneg %p88
        $region78: #{tpu_custom_call.1} parent=27 // pred_check_branch
          %1404 = sbr.rel (%p1402) target = $region80
        $region79: #{tpu_custom_call.1} parent=27 // pred_region
          %1405 = dma.done [#allocation6], 2048
        $region80: #{tpu_custom_call.1} parent=27 // pred_fallthru
          _
      $region28: #{tpu_custom_call.1} parent=5 // pred_fallthru
        _
      %p1406 = scmp.le.s32.totalorder 2, %s11
      // Predicated region
      $region81: #{tpu_custom_call.1} parent=5 // pred_check
        %p1407 = pneg %p1406
      $region82: #{tpu_custom_call.1} parent=5 // pred_check_branch
        %1409 = sbr.rel (%p1407) target = $region84
      $region83: #{tpu_custom_call.1} parent=5 // pred_region
        %s1410 = ssub.s32 %s11, 2
      $region84: #{tpu_custom_call.1} parent=5 // pred_fallthru
        _
    $region6: #{tpu_custom_call.1} parent=1 // loop_footer
      %s15 = sadd.s32 1, %s11
    $region7: #{tpu_custom_call.1} parent=1 // loop_footer_branch
      %10 = sbr.rel target = $region3
    $region8: #{tpu_custom_call.1} parent=1 // loop_exit
      _
    %1411 = vsyncpa [#allocation5], 1
    %s1412 = scalar_lea.sflag [#allocation5], 1
    %1413 = vsyncpa %s1412, 1
    %1414 = vsyncpa [#allocation8], 1
    %1415 = vsyncpa [#allocation6], 1
    %s1416 = scalar_lea.sflag [#allocation6], 1
    %1417 = vsyncpa %s1416, 1

</llo_original>
